<compile_context>
chip_gen: v6e
topology: v6e:2x2x1
jax: 0.10.0
libtpu: 0.0.40
codegen_flags: <defaults>
</compile_context>

<pallas_src>
import functools

import jax
import jax.numpy as jnp
from jax.experimental import pallas as pl
from jax.experimental.pallas import tpu as pltpu


def _round_up(x, m):
    return ((x + m - 1) // m) * m


# Kernel lane layout uses gate blocks (f, i, o, g).
# torch.nn.LSTM stacks gate rows as (i, f, g, o) -> torch gate indices (1, 0, 3, 2).
_GATE_ORDER = (1, 0, 3, 2)


def _layout(n_features, embedding_dim):
    """Static lane/row layout for the packed weight slabs (tight gate packing)."""
    H1, H2 = 2 * embedding_dim, embedding_dim          # rnn1 / rnn2 hidden sizes
    PG1 = _round_up(H1, 64)                            # per-gate lane stride, layer 1
    PG2 = _round_up(H2, 32)                            # per-gate lane stride, layer 2
    N1, N2 = 4 * PG1, 4 * PG2                          # gate-row widths (mult. of 128)
    K = _round_up(H1 + H2, 128)                        # packed-state width (fused dot K)
    OUT_W = _round_up(H2, 128)                         # lane-dense output width
    R_WIH1 = K                                         # slab row of the Wih1 block
    R_B = K + _round_up(n_features, 8)                 # slab row of bias / act-const rows
    R_TOT = R_B + 8
    W = N1 + N2                                        # main slab lane width
    # tight-packing feasibility (holds for all practical embedding_dim)
    assert H1 + H2 <= K <= min(N1, N2) and OUT_W <= N2 and H1 <= PG1 and H2 <= PG2
    return dict(H1=H1, H2=H2, PG1=PG1, PG2=PG2, N1=N1, N2=N2, K=K, OUT_W=OUT_W,
                R_WIH1=R_WIH1, R_B=R_B, R_TOT=R_TOT, W=W)


# ----------------------------------------------------------------------------
# Pallas kernel: fused 2-layer LSTM recurrence (batch = 1), fully unrolled.
# ----------------------------------------------------------------------------
def _encoder_lstm_kernel(x_ref, w_ref, w2_ref, o_ref, *,
                         seq_len, nf, H1, PG1, PG2, N1, N2, K, OUT_W,
                         R_WIH1, R_B):
    f32 = jnp.float32

    # ---- small loop-resident constants (a handful of vregs) ------------------
    wih1 = w_ref[R_WIH1:R_WIH1 + nf, 0:N1]           # (nf, N1) layer-1 input projection
    brow = w_ref[R_B + 0:R_B + 1, :]                 # (1, N1+N2) fused biases [b1 | b2]
    arow = w_ref[R_B + 1:R_B + 2, :]                 # activation scale (0.5 sig / 1 tanh)
    crow = w_ref[R_B + 2:R_B + 3, :]                 # activation offset (0.5 sig / 0 tanh)
    b1, b2 = brow[:, 0:N1], brow[:, N1:]
    a1, a2 = arow[:, 0:N1], arow[:, N1:]
    c1o, c2o = crow[:, 0:N1], crow[:, N1:]

    # lane mask selecting the h1 part of the packed recurrence state
    lane = jax.lax.broadcasted_iota(jnp.int32, (1, K), 1)
    h1_lane = lane < H1

    # ---- hoisted layer-1 input projection:  xg1[t] = x[t] @ Wih1 + b1 --------
    x = x_ref[...]                                   # (seq_len, nf)
    if nf == 1:
        xg1 = x * wih1 + b1                          # VPU broadcast; no degenerate K=1 dot
    else:
        xg1 = jnp.dot(x, wih1, preferred_element_type=f32) + b1

    def act(pre, a, c):
        # per-lane sigmoid / tanh in ONE EUP pass: sigmoid(x) = 0.5*tanh(0.5x)+0.5
        t = jnp.tanh(pre * a)
        return t * a + c

    # ---- state: s = [h1 | h2 | pad] (1, K);  c kept in the f-gate lane block --
    s = jnp.zeros((1, K), f32)
    cs1 = jnp.zeros((1, N1), f32)                    # real c1 in lanes [0, H1)
    cs2 = jnp.zeros((1, N2), f32)                    # real c2 in lanes [0, H2)
    h2f = jnp.zeros((1, N2), f32)

    # fully unrolled recurrence (seq_len is static and small)
    for t in range(seq_len):
        # one fused recurrent projection for BOTH layers (block-diagonal W_rec):
        # zero rows of W_rec kill every junk/pad lane of the packed state.
        rec = jnp.dot(s, w_ref[0:K, :], preferred_element_type=f32)   # (1, N1+N2)

        # ---------------- layer 1 (rnn1) ----------------  gate blocks [f|i|o|g]
        g1 = act(xg1[t:t + 1, :] + rec[:, 0:N1], a1, c1o)
        g1r = jnp.roll(g1, -2 * PG1, axis=1)                 # [o|g|f|i]
        cs1 = g1 * cs1 + jnp.roll(g1 * g1r, -PG1, axis=1)    # f*c + i*g  @ lanes [0,H1)
        h1f = g1r * jnp.tanh(cs1)                            # o*tanh(c)  @ lanes [0,H1)
        h1k = h1f[:, 0:K]                                    # junk lanes: zero rows in W2

        # ---------------- layer 2 (rnn2) ----------------
        g2 = act(rec[:, N1:] + b2 +
                 jnp.dot(h1k, w2_ref[...], preferred_element_type=f32), a2, c2o)
        g2r = jnp.roll(g2, -2 * PG2, axis=1)
        cs2 = g2 * cs2 + jnp.roll(g2 * g2r, -PG2, axis=1)    # @ lanes [0,H2)
        h2f = g2r * jnp.tanh(cs2)

        # packed state for next step: h1 @ [0,H1), h2 @ [H1,H1+H2), rest junk
        s = jnp.where(h1_lane, h1k, jnp.roll(h2f[:, 0:K], H1, axis=1))

    o_ref[...] = h2f[:, 0:OUT_W]                             # lane-dense (1, OUT_W)


# ----------------------------------------------------------------------------
# Wrapper ("Encoder.forward")
# ----------------------------------------------------------------------------
def encoder_forward(x, params, *, seq_len, n_features, embedding_dim):
    lay = _layout(n_features, embedding_dim)

    # x.reshape((1, seq_len, n_features)); batch==1 squeezed -> (seq_len, n_features)
    x2d = jnp.reshape(x, (seq_len, n_features)).astype(jnp.float32)

    vmem = pl.BlockSpec(memory_space=pltpu.MemorySpace.VMEM)
    kernel = functools.partial(
        _encoder_lstm_kernel,
        seq_len=seq_len, nf=n_features,
        H1=lay["H1"], PG1=lay["PG1"], PG2=lay["PG2"],
        N1=lay["N1"], N2=lay["N2"], K=lay["K"], OUT_W=lay["OUT_W"],
        R_WIH1=lay["R_WIH1"], R_B=lay["R_B"])

    h_pad = pl.pallas_call(
        kernel,
        out_shape=jax.ShapeDtypeStruct((1, lay["OUT_W"]), jnp.float32),
        in_specs=[vmem, vmem, vmem],       # 3 small DMAs: x, main slab, Wih2 slab
        out_specs=vmem,
    )(x2d, params["slab"], params["wih2_slab"])

    # hidden_n.reshape((n_features, embedding_dim))  (valid because n_features == 1)
    return jnp.reshape(h_pad[:, :embedding_dim], (n_features, embedding_dim))


# ----------------------------------------------------------------------------
# Parameter construction (torch.nn.LSTM shapes) + packing into the kernel slabs.
# ----------------------------------------------------------------------------
def _pack_gates_weight(w_t, hid, pg):
    """torch (4*hid, k_in) -> (k_in, 4*pg): transposed, gate blocks [f,i,o,g], 0-padded."""
    k_in = w_t.shape[1]
    out = jnp.zeros((k_in, 4 * pg), jnp.float32)
    for b, g in enumerate(_GATE_ORDER):
        out = out.at[:, b * pg:b * pg + hid].set(w_t[g * hid:(g + 1) * hid, :].T)
    return out


def _pack_gates_bias(b_vec, hid, pg):
    out = jnp.zeros((4 * pg,), jnp.float32)
    for b, g in enumerate(_GATE_ORDER):
        out = out.at[b * pg:b * pg + hid].set(b_vec[g * hid:(g + 1) * hid])
    return out


def _act_consts(pg):
    # blocks f, i, o -> sigmoid (scale 0.5, offset 0.5); block g -> tanh (1, 0)
    a = jnp.concatenate([jnp.full((3 * pg,), 0.5, jnp.float32),
                         jnp.ones((pg,), jnp.float32)])
    c = jnp.concatenate([jnp.full((3 * pg,), 0.5, jnp.float32),
                         jnp.zeros((pg,), jnp.float32)])
    return a, c


def make_params(key, n_features, embedding_dim):
    lay = _layout(n_features, embedding_dim)
    H1, H2 = lay["H1"], lay["H2"]
    PG1, PG2, N1, N2, K = lay["PG1"], lay["PG2"], lay["N1"], lay["N2"], lay["K"]

    ks = jax.random.split(key, 8)
    s1 = 1.0 / jnp.sqrt(H1)
    s2 = 1.0 / jnp.sqrt(H2)
    u = lambda k, shape, s: jax.random.uniform(k, shape, jnp.float32, -s, s)

    # torch.nn.LSTM parameter shapes, gate row order (i, f, g, o)
    wih1 = u(ks[0], (4 * H1, n_features), s1)
    whh1 = u(ks[1], (4 * H1, H1), s1)
    bih1 = u(ks[2], (4 * H1,), s1)
    bhh1 = u(ks[3], (4 * H1,), s1)
    wih2 = u(ks[4], (4 * H2, H1), s2)
    whh2 = u(ks[5], (4 * H2, H2), s2)
    bih2 = u(ks[6], (4 * H2,), s2)
    bhh2 = u(ks[7], (4 * H2,), s2)

    # padded / reordered kernel weights
    whh1_p = _pack_gates_weight(whh1, H1, PG1)   # (H1, N1)
    whh2_p = _pack_gates_weight(whh2, H2, PG2)   # (H2, N2)
    wih1_p = _pack_gates_weight(wih1, H1, PG1)   # (nf, N1)
    wih2_p = _pack_gates_weight(wih2, H2, PG2)   # (H1, N2)
    b1_p = _pack_gates_bias(bih1 + bhh1, H1, PG1)
    b2_p = _pack_gates_bias(bih2 + bhh2, H2, PG2)
    a1c, c1c = _act_consts(PG1)
    a2c, c2c = _act_consts(PG2)

    # main slab: fused block-diagonal recurrence + Wih1 + biases + act constants
    slab = jnp.zeros((lay["R_TOT"], lay["W"]), jnp.float32)
    slab = slab.at[0:H1, 0:N1].set(whh1_p)                      # W_rec, h1 rows
    slab = slab.at[H1:H1 + H2, N1:N1 + N2].set(whh2_p)          # W_rec, h2 rows
    slab = slab.at[lay["R_WIH1"]:lay["R_WIH1"] + n_features, 0:N1].set(wih1_p)
    slab = slab.at[lay["R_B"] + 0, 0:N1].set(b1_p)
    slab = slab.at[lay["R_B"] + 0, N1:].set(b2_p)
    slab = slab.at[lay["R_B"] + 1, 0:N1].set(a1c)
    slab = slab.at[lay["R_B"] + 1, N1:].set(a2c)
    slab = slab.at[lay["R_B"] + 2, 0:N1].set(c1c)
    slab = slab.at[lay["R_B"] + 2, N1:].set(c2c)

    # second slab: layer-2 input projection; rows >= H1 are zero so the junk
    # lanes of the padded h1 operand cannot leak into the layer-2 gates.
    w2 = jnp.zeros((K, N2), jnp.float32).at[0:H1, :].set(wih2_p)

    return {
        "slab": slab, "wih2_slab": w2,
        # raw torch-layout parameters kept for the pure-JAX reference check
        "wih1": wih1, "whh1": whh1, "bih1": bih1, "bhh1": bhh1,
        "wih2": wih2, "whh2": whh2, "bih2": bih2, "bhh2": bhh2,
    }


# ----------------------------------------------------------------------------
# Pure-JAX reference using the RAW torch-layout weights (also validates the
# gate reordering / tight padding / packing pipeline).
# ----------------------------------------------------------------------------
def encoder_reference(x, params, *, seq_len, n_features, embedding_dim):
    hid1, hid2 = 2 * embedding_dim, embedding_dim
    x2d = jnp.reshape(x, (seq_len, n_features)).astype(jnp.float32)
    dot = functools.partial(jnp.dot, precision=jax.lax.Precision.HIGHEST)

    def cell(x_t, h, c, wih, whh, bih, bhh, hid):
        g = dot(x_t, wih.T) + dot(h, whh.T) + bih + bhh
        i = jax.nn.sigmoid(g[:, 0 * hid:1 * hid])
        f = jax.nn.sigmoid(g[:, 1 * hid:2 * hid])
        gg = jnp.tanh(g[:, 2 * hid:3 * hid])
        o = jax.nn.sigmoid(g[:, 3 * hid:4 * hid])
        c = f * c + i * gg
        return o * jnp.tanh(c), c

    h1 = jnp.zeros((1, hid1), jnp.float32)
    c1 = jnp.zeros((1, hid1), jnp.float32)
    h2 = jnp.zeros((1, hid2), jnp.float32)
    c2 = jnp.zeros((1, hid2), jnp.float32)
    for t in range(seq_len):
        x_t = x2d[t:t + 1, :]
        h1, c1 = cell(x_t, h1, c1, params["wih1"], params["whh1"],
                      params["bih1"], params["bhh1"], hid1)
        h2, c2 = cell(h1, h2, c2, params["wih2"], params["whh2"],
                      params["bih2"], params["bhh2"], hid2)
    return jnp.reshape(h2, (n_features, embedding_dim))


if __name__ == "__main__":
    # Small shapes consistent with the module; n_features must be 1 for the
    # final reshape (as in the original usage of this Encoder).
    seq_len, n_features, embedding_dim = 8, 1, 32

    key = jax.random.PRNGKey(0)
    k_p, k_x = jax.random.split(key)
    params = make_params(k_p, n_features, embedding_dim)
    x = jax.random.normal(k_x, (seq_len, n_features), jnp.float32)

    out = encoder_forward(x, params, seq_len=seq_len,
                          n_features=n_features, embedding_dim=embedding_dim)
    out = jax.block_until_ready(out)

    ref = encoder_reference(x, params, seq_len=seq_len,
                            n_features=n_features, embedding_dim=embedding_dim)
    assert out.shape == (n_features, embedding_dim)
    assert jnp.allclose(out, ref, atol=2e-5, rtol=2e-5), "mismatch vs reference"

    print("KERNEL_OK")
</pallas_src>

<mosaic_0001>
module attributes {stable_mosaic.version = 11 : i64} {
  func.func @_encoder_lstm_kernel(%arg0: memref<8x1xf32, #tpu.memory_space<vmem>>, %arg1: memref<144x384xf32, #tpu.memory_space<vmem>>, %arg2: memref<128x128xf32, #tpu.memory_space<vmem>>, %arg3: memref<1x128xf32, #tpu.memory_space<vmem>>) attributes {dimension_semantics = [], scalar_prefetch = 0 : i64, scratch_operands = 0 : i64, tpu.core_type = #tpu.core_type<tc>} {
    %c128 = arith.constant 128 : index
    %c0 = arith.constant 0 : index
    %0 = vector.load %arg1[%c128, %c0] : memref<144x384xf32, #tpu.memory_space<vmem>>, vector<1x256xf32>
    %c136 = arith.constant 136 : index
    %c0_0 = arith.constant 0 : index
    %1 = vector.load %arg1[%c136, %c0_0] : memref<144x384xf32, #tpu.memory_space<vmem>>, vector<1x384xf32>
    %c137 = arith.constant 137 : index
    %c0_1 = arith.constant 0 : index
    %2 = vector.load %arg1[%c137, %c0_1] : memref<144x384xf32, #tpu.memory_space<vmem>>, vector<1x384xf32>
    %c138 = arith.constant 138 : index
    %c0_2 = arith.constant 0 : index
    %3 = vector.load %arg1[%c138, %c0_2] : memref<144x384xf32, #tpu.memory_space<vmem>>, vector<1x384xf32>
    %4 = vector.extract_strided_slice %1 {offsets = [0, 0], sizes = [1, 256], strides = [1, 1]} : vector<1x384xf32> to vector<1x256xf32>
    %5 = vector.extract_strided_slice %1 {offsets = [0, 256], sizes = [1, 128], strides = [1, 1]} : vector<1x384xf32> to vector<1x128xf32>
    %6 = vector.extract_strided_slice %2 {offsets = [0, 0], sizes = [1, 256], strides = [1, 1]} : vector<1x384xf32> to vector<1x256xf32>
    %7 = vector.extract_strided_slice %2 {offsets = [0, 256], sizes = [1, 128], strides = [1, 1]} : vector<1x384xf32> to vector<1x128xf32>
    %8 = vector.extract_strided_slice %3 {offsets = [0, 0], sizes = [1, 256], strides = [1, 1]} : vector<1x384xf32> to vector<1x256xf32>
    %9 = vector.extract_strided_slice %3 {offsets = [0, 256], sizes = [1, 128], strides = [1, 1]} : vector<1x384xf32> to vector<1x128xf32>
    %10 = tpu.iota {dimensions = array<i32: 1>} : vector<1x128xi32>
    %c64_i32 = arith.constant 64 : i32
    %11 = vector.broadcast %c64_i32 : i32 to vector<1x128xi32>
    %12 = arith.cmpi slt, %10, %11 : vector<1x128xi32>
    %c0_3 = arith.constant 0 : index
    %c0_4 = arith.constant 0 : index
    %13 = vector.load %arg0[%c0_3, %c0_4] : memref<8x1xf32, #tpu.memory_space<vmem>>, vector<8x1xf32>
    %14 = vector.broadcast %13 : vector<8x1xf32> to vector<8x256xf32>
    %15 = vector.broadcast %0 : vector<1x256xf32> to vector<8x256xf32>
    %16 = arith.mulf %14, %15 : vector<8x256xf32>
    %17 = vector.broadcast %4 : vector<1x256xf32> to vector<8x256xf32>
    %18 = arith.addf %16, %17 : vector<8x256xf32>
    %cst = arith.constant 0.000000e+00 : f32
    %19 = vector.broadcast %cst : f32 to vector<1x128xf32>
    %cst_5 = arith.constant 0.000000e+00 : f32
    %20 = vector.broadcast %cst_5 : f32 to vector<1x256xf32>
    %cst_6 = arith.constant 0.000000e+00 : f32
    %21 = vector.broadcast %cst_6 : f32 to vector<1x128xf32>
    %c0_7 = arith.constant 0 : index
    %c0_8 = arith.constant 0 : index
    %22 = vector.load %arg1[%c0_7, %c0_8] : memref<144x384xf32, #tpu.memory_space<vmem>>, vector<128x384xf32>
    %cst_9 = arith.constant dense<0.000000e+00> : vector<1x384xf32>
    %23 = tpu.matmul %19, %22, %cst_9 {dimension_numbers = #tpu.dot_dimension_numbers<[1], [0], [0], [1], [0, 0, 1, 1], [], []>} : vector<1x128xf32>, vector<128x384xf32>, vector<1x384xf32> -> vector<1x384xf32>
    %24 = vector.extract_strided_slice %18 {offsets = [0, 0], sizes = [1, 256], strides = [1, 1]} : vector<8x256xf32> to vector<1x256xf32>
    %25 = vector.extract_strided_slice %23 {offsets = [0, 0], sizes = [1, 256], strides = [1, 1]} : vector<1x384xf32> to vector<1x256xf32>
    %26 = arith.addf %24, %25 : vector<1x256xf32>
    %27 = arith.mulf %26, %6 : vector<1x256xf32>
    %28 = math.tanh %27 : vector<1x256xf32>
    %29 = arith.mulf %28, %6 : vector<1x256xf32>
    %30 = arith.addf %29, %8 : vector<1x256xf32>
    %31 = vector.extract_strided_slice %30 {offsets = [0, 128], sizes = [1, 128], strides = [1, 1]} : vector<1x256xf32> to vector<1x128xf32>
    %32 = vector.extract_strided_slice %30 {offsets = [0, 0], sizes = [1, 128], strides = [1, 1]} : vector<1x256xf32> to vector<1x128xf32>
    %33 = tpu.concatenate %31, %32 in 1 : vector<1x128xf32>, vector<1x128xf32> -> vector<1x256xf32>
    %34 = arith.mulf %30, %20 : vector<1x256xf32>
    %35 = arith.mulf %30, %33 : vector<1x256xf32>
    %36 = vector.extract_strided_slice %35 {offsets = [0, 64], sizes = [1, 192], strides = [1, 1]} : vector<1x256xf32> to vector<1x192xf32>
    %37 = vector.extract_strided_slice %35 {offsets = [0, 0], sizes = [1, 64], strides = [1, 1]} : vector<1x256xf32> to vector<1x64xf32>
    %38 = tpu.concatenate %36, %37 in 1 : vector<1x192xf32>, vector<1x64xf32> -> vector<1x256xf32>
    %39 = arith.addf %34, %38 : vector<1x256xf32>
    %40 = math.tanh %39 : vector<1x256xf32>
    %41 = arith.mulf %33, %40 : vector<1x256xf32>
    %42 = vector.extract_strided_slice %41 {offsets = [0, 0], sizes = [1, 128], strides = [1, 1]} : vector<1x256xf32> to vector<1x128xf32>
    %43 = vector.extract_strided_slice %23 {offsets = [0, 256], sizes = [1, 128], strides = [1, 1]} : vector<1x384xf32> to vector<1x128xf32>
    %44 = arith.addf %43, %5 : vector<1x128xf32>
    %c0_10 = arith.constant 0 : index
    %c0_11 = arith.constant 0 : index
    %45 = vector.load %arg2[%c0_10, %c0_11] : memref<128x128xf32, #tpu.memory_space<vmem>>, vector<128x128xf32>
    %cst_12 = arith.constant dense<0.000000e+00> : vector<1x128xf32>
    %46 = tpu.matmul %42, %45, %cst_12 {dimension_numbers = #tpu.dot_dimension_numbers<[1], [0], [0], [1], [0, 0, 1, 1], [], []>} : vector<1x128xf32>, vector<128x128xf32>, vector<1x128xf32> -> vector<1x128xf32>
    %47 = arith.addf %44, %46 : vector<1x128xf32>
    %48 = arith.mulf %47, %7 : vector<1x128xf32>
    %49 = math.tanh %48 : vector<1x128xf32>
    %50 = arith.mulf %49, %7 : vector<1x128xf32>
    %51 = arith.addf %50, %9 : vector<1x128xf32>
    %52 = vector.extract_strided_slice %51 {offsets = [0, 64], sizes = [1, 64], strides = [1, 1]} : vector<1x128xf32> to vector<1x64xf32>
    %53 = vector.extract_strided_slice %51 {offsets = [0, 0], sizes = [1, 64], strides = [1, 1]} : vector<1x128xf32> to vector<1x64xf32>
    %54 = tpu.concatenate %52, %53 in 1 : vector<1x64xf32>, vector<1x64xf32> -> vector<1x128xf32>
    %55 = arith.mulf %51, %21 : vector<1x128xf32>
    %56 = arith.mulf %51, %54 : vector<1x128xf32>
    %57 = vector.extract_strided_slice %56 {offsets = [0, 32], sizes = [1, 96], strides = [1, 1]} : vector<1x128xf32> to vector<1x96xf32>
    %58 = vector.extract_strided_slice %56 {offsets = [0, 0], sizes = [1, 32], strides = [1, 1]} : vector<1x128xf32> to vector<1x32xf32>
    %59 = tpu.concatenate %57, %58 in 1 : vector<1x96xf32>, vector<1x32xf32> -> vector<1x128xf32>
    %60 = arith.addf %55, %59 : vector<1x128xf32>
    %61 = math.tanh %60 : vector<1x128xf32>
    %62 = arith.mulf %54, %61 : vector<1x128xf32>
    %63 = vector.extract_strided_slice %62 {offsets = [0, 64], sizes = [1, 64], strides = [1, 1]} : vector<1x128xf32> to vector<1x64xf32>
    %64 = vector.extract_strided_slice %62 {offsets = [0, 0], sizes = [1, 64], strides = [1, 1]} : vector<1x128xf32> to vector<1x64xf32>
    %65 = tpu.concatenate %63, %64 in 1 : vector<1x64xf32>, vector<1x64xf32> -> vector<1x128xf32>
    %66 = arith.select %12, %42, %65 : vector<1x128xi1>, vector<1x128xf32>
    %c0_13 = arith.constant 0 : index
    %c0_14 = arith.constant 0 : index
    %67 = vector.load %arg1[%c0_13, %c0_14] : memref<144x384xf32, #tpu.memory_space<vmem>>, vector<128x384xf32>
    %cst_15 = arith.constant dense<0.000000e+00> : vector<1x384xf32>
    %68 = tpu.matmul %66, %67, %cst_15 {dimension_numbers = #tpu.dot_dimension_numbers<[1], [0], [0], [1], [0, 0, 1, 1], [], []>} : vector<1x128xf32>, vector<128x384xf32>, vector<1x384xf32> -> vector<1x384xf32>
    %69 = vector.extract_strided_slice %18 {offsets = [1, 0], sizes = [1, 256], strides = [1, 1]} : vector<8x256xf32> to vector<1x256xf32>
    %70 = vector.extract_strided_slice %68 {offsets = [0, 0], sizes = [1, 256], strides = [1, 1]} : vector<1x384xf32> to vector<1x256xf32>
    %71 = arith.addf %69, %70 : vector<1x256xf32>
    %72 = arith.mulf %71, %6 : vector<1x256xf32>
    %73 = math.tanh %72 : vector<1x256xf32>
    %74 = arith.mulf %73, %6 : vector<1x256xf32>
    %75 = arith.addf %74, %8 : vector<1x256xf32>
    %76 = vector.extract_strided_slice %75 {offsets = [0, 128], sizes = [1, 128], strides = [1, 1]} : vector<1x256xf32> to vector<1x128xf32>
    %77 = vector.extract_strided_slice %75 {offsets = [0, 0], sizes = [1, 128], strides = [1, 1]} : vector<1x256xf32> to vector<1x128xf32>
    %78 = tpu.concatenate %76, %77 in 1 : vector<1x128xf32>, vector<1x128xf32> -> vector<1x256xf32>
    %79 = arith.mulf %75, %39 : vector<1x256xf32>
    %80 = arith.mulf %75, %78 : vector<1x256xf32>
    %81 = vector.extract_strided_slice %80 {offsets = [0, 64], sizes = [1, 192], strides = [1, 1]} : vector<1x256xf32> to vector<1x192xf32>
    %82 = vector.extract_strided_slice %80 {offsets = [0, 0], sizes = [1, 64], strides = [1, 1]} : vector<1x256xf32> to vector<1x64xf32>
    %83 = tpu.concatenate %81, %82 in 1 : vector<1x192xf32>, vector<1x64xf32> -> vector<1x256xf32>
    %84 = arith.addf %79, %83 : vector<1x256xf32>
    %85 = math.tanh %84 : vector<1x256xf32>
    %86 = arith.mulf %78, %85 : vector<1x256xf32>
    %87 = vector.extract_strided_slice %86 {offsets = [0, 0], sizes = [1, 128], strides = [1, 1]} : vector<1x256xf32> to vector<1x128xf32>
    %88 = vector.extract_strided_slice %68 {offsets = [0, 256], sizes = [1, 128], strides = [1, 1]} : vector<1x384xf32> to vector<1x128xf32>
    %89 = arith.addf %88, %5 : vector<1x128xf32>
    %c0_16 = arith.constant 0 : index
    %c0_17 = arith.constant 0 : index
    %90 = vector.load %arg2[%c0_16, %c0_17] : memref<128x128xf32, #tpu.memory_space<vmem>>, vector<128x128xf32>
    %cst_18 = arith.constant dense<0.000000e+00> : vector<1x128xf32>
    %91 = tpu.matmul %87, %90, %cst_18 {dimension_numbers = #tpu.dot_dimension_numbers<[1], [0], [0], [1], [0, 0, 1, 1], [], []>} : vector<1x128xf32>, vector<128x128xf32>, vector<1x128xf32> -> vector<1x128xf32>
    %92 = arith.addf %89, %91 : vector<1x128xf32>
    %93 = arith.mulf %92, %7 : vector<1x128xf32>
    %94 = math.tanh %93 : vector<1x128xf32>
    %95 = arith.mulf %94, %7 : vector<1x128xf32>
    %96 = arith.addf %95, %9 : vector<1x128xf32>
    %97 = vector.extract_strided_slice %96 {offsets = [0, 64], sizes = [1, 64], strides = [1, 1]} : vector<1x128xf32> to vector<1x64xf32>
    %98 = vector.extract_strided_slice %96 {offsets = [0, 0], sizes = [1, 64], strides = [1, 1]} : vector<1x128xf32> to vector<1x64xf32>
    %99 = tpu.concatenate %97, %98 in 1 : vector<1x64xf32>, vector<1x64xf32> -> vector<1x128xf32>
    %100 = arith.mulf %96, %60 : vector<1x128xf32>
    %101 = arith.mulf %96, %99 : vector<1x128xf32>
    %102 = vector.extract_strided_slice %101 {offsets = [0, 32], sizes = [1, 96], strides = [1, 1]} : vector<1x128xf32> to vector<1x96xf32>
    %103 = vector.extract_strided_slice %101 {offsets = [0, 0], sizes = [1, 32], strides = [1, 1]} : vector<1x128xf32> to vector<1x32xf32>
    %104 = tpu.concatenate %102, %103 in 1 : vector<1x96xf32>, vector<1x32xf32> -> vector<1x128xf32>
    %105 = arith.addf %100, %104 : vector<1x128xf32>
    %106 = math.tanh %105 : vector<1x128xf32>
    %107 = arith.mulf %99, %106 : vector<1x128xf32>
    %108 = vector.extract_strided_slice %107 {offsets = [0, 64], sizes = [1, 64], strides = [1, 1]} : vector<1x128xf32> to vector<1x64xf32>
    %109 = vector.extract_strided_slice %107 {offsets = [0, 0], sizes = [1, 64], strides = [1, 1]} : vector<1x128xf32> to vector<1x64xf32>
    %110 = tpu.concatenate %108, %109 in 1 : vector<1x64xf32>, vector<1x64xf32> -> vector<1x128xf32>
    %111 = arith.select %12, %87, %110 : vector<1x128xi1>, vector<1x128xf32>
    %c0_19 = arith.constant 0 : index
    %c0_20 = arith.constant 0 : index
    %112 = vector.load %arg1[%c0_19, %c0_20] : memref<144x384xf32, #tpu.memory_space<vmem>>, vector<128x384xf32>
    %cst_21 = arith.constant dense<0.000000e+00> : vector<1x384xf32>
    %113 = tpu.matmul %111, %112, %cst_21 {dimension_numbers = #tpu.dot_dimension_numbers<[1], [0], [0], [1], [0, 0, 1, 1], [], []>} : vector<1x128xf32>, vector<128x384xf32>, vector<1x384xf32> -> vector<1x384xf32>
    %114 = vector.extract_strided_slice %18 {offsets = [2, 0], sizes = [1, 256], strides = [1, 1]} : vector<8x256xf32> to vector<1x256xf32>
    %115 = vector.extract_strided_slice %113 {offsets = [0, 0], sizes = [1, 256], strides = [1, 1]} : vector<1x384xf32> to vector<1x256xf32>
    %116 = arith.addf %114, %115 : vector<1x256xf32>
    %117 = arith.mulf %116, %6 : vector<1x256xf32>
    %118 = math.tanh %117 : vector<1x256xf32>
    %119 = arith.mulf %118, %6 : vector<1x256xf32>
    %120 = arith.addf %119, %8 : vector<1x256xf32>
    %121 = vector.extract_strided_slice %120 {offsets = [0, 128], sizes = [1, 128], strides = [1, 1]} : vector<1x256xf32> to vector<1x128xf32>
    %122 = vector.extract_strided_slice %120 {offsets = [0, 0], sizes = [1, 128], strides = [1, 1]} : vector<1x256xf32> to vector<1x128xf32>
    %123 = tpu.concatenate %121, %122 in 1 : vector<1x128xf32>, vector<1x128xf32> -> vector<1x256xf32>
    %124 = arith.mulf %120, %84 : vector<1x256xf32>
    %125 = arith.mulf %120, %123 : vector<1x256xf32>
    %126 = vector.extract_strided_slice %125 {offsets = [0, 64], sizes = [1, 192], strides = [1, 1]} : vector<1x256xf32> to vector<1x192xf32>
    %127 = vector.extract_strided_slice %125 {offsets = [0, 0], sizes = [1, 64], strides = [1, 1]} : vector<1x256xf32> to vector<1x64xf32>
    %128 = tpu.concatenate %126, %127 in 1 : vector<1x192xf32>, vector<1x64xf32> -> vector<1x256xf32>
    %129 = arith.addf %124, %128 : vector<1x256xf32>
    %130 = math.tanh %129 : vector<1x256xf32>
    %131 = arith.mulf %123, %130 : vector<1x256xf32>
    %132 = vector.extract_strided_slice %131 {offsets = [0, 0], sizes = [1, 128], strides = [1, 1]} : vector<1x256xf32> to vector<1x128xf32>
    %133 = vector.extract_strided_slice %113 {offsets = [0, 256], sizes = [1, 128], strides = [1, 1]} : vector<1x384xf32> to vector<1x128xf32>
    %134 = arith.addf %133, %5 : vector<1x128xf32>
    %c0_22 = arith.constant 0 : index
    %c0_23 = arith.constant 0 : index
    %135 = vector.load %arg2[%c0_22, %c0_23] : memref<128x128xf32, #tpu.memory_space<vmem>>, vector<128x128xf32>
    %cst_24 = arith.constant dense<0.000000e+00> : vector<1x128xf32>
    %136 = tpu.matmul %132, %135, %cst_24 {dimension_numbers = #tpu.dot_dimension_numbers<[1], [0], [0], [1], [0, 0, 1, 1], [], []>} : vector<1x128xf32>, vector<128x128xf32>, vector<1x128xf32> -> vector<1x128xf32>
    %137 = arith.addf %134, %136 : vector<1x128xf32>
    %138 = arith.mulf %137, %7 : vector<1x128xf32>
    %139 = math.tanh %138 : vector<1x128xf32>
    %140 = arith.mulf %139, %7 : vector<1x128xf32>
    %141 = arith.addf %140, %9 : vector<1x128xf32>
    %142 = vector.extract_strided_slice %141 {offsets = [0, 64], sizes = [1, 64], strides = [1, 1]} : vector<1x128xf32> to vector<1x64xf32>
    %143 = vector.extract_strided_slice %141 {offsets = [0, 0], sizes = [1, 64], strides = [1, 1]} : vector<1x128xf32> to vector<1x64xf32>
    %144 = tpu.concatenate %142, %143 in 1 : vector<1x64xf32>, vector<1x64xf32> -> vector<1x128xf32>
    %145 = arith.mulf %141, %105 : vector<1x128xf32>
    %146 = arith.mulf %141, %144 : vector<1x128xf32>
    %147 = vector.extract_strided_slice %146 {offsets = [0, 32], sizes = [1, 96], strides = [1, 1]} : vector<1x128xf32> to vector<1x96xf32>
    %148 = vector.extract_strided_slice %146 {offsets = [0, 0], sizes = [1, 32], strides = [1, 1]} : vector<1x128xf32> to vector<1x32xf32>
    %149 = tpu.concatenate %147, %148 in 1 : vector<1x96xf32>, vector<1x32xf32> -> vector<1x128xf32>
    %150 = arith.addf %145, %149 : vector<1x128xf32>
    %151 = math.tanh %150 : vector<1x128xf32>
    %152 = arith.mulf %144, %151 : vector<1x128xf32>
    %153 = vector.extract_strided_slice %152 {offsets = [0, 64], sizes = [1, 64], strides = [1, 1]} : vector<1x128xf32> to vector<1x64xf32>
    %154 = vector.extract_strided_slice %152 {offsets = [0, 0], sizes = [1, 64], strides = [1, 1]} : vector<1x128xf32> to vector<1x64xf32>
    %155 = tpu.concatenate %153, %154 in 1 : vector<1x64xf32>, vector<1x64xf32> -> vector<1x128xf32>
    %156 = arith.select %12, %132, %155 : vector<1x128xi1>, vector<1x128xf32>
    %c0_25 = arith.constant 0 : index
    %c0_26 = arith.constant 0 : index
    %157 = vector.load %arg1[%c0_25, %c0_26] : memref<144x384xf32, #tpu.memory_space<vmem>>, vector<128x384xf32>
    %cst_27 = arith.constant dense<0.000000e+00> : vector<1x384xf32>
    %158 = tpu.matmul %156, %157, %cst_27 {dimension_numbers = #tpu.dot_dimension_numbers<[1], [0], [0], [1], [0, 0, 1, 1], [], []>} : vector<1x128xf32>, vector<128x384xf32>, vector<1x384xf32> -> vector<1x384xf32>
    %159 = vector.extract_strided_slice %18 {offsets = [3, 0], sizes = [1, 256], strides = [1, 1]} : vector<8x256xf32> to vector<1x256xf32>
    %160 = vector.extract_strided_slice %158 {offsets = [0, 0], sizes = [1, 256], strides = [1, 1]} : vector<1x384xf32> to vector<1x256xf32>
    %161 = arith.addf %159, %160 : vector<1x256xf32>
    %162 = arith.mulf %161, %6 : vector<1x256xf32>
    %163 = math.tanh %162 : vector<1x256xf32>
    %164 = arith.mulf %163, %6 : vector<1x256xf32>
    %165 = arith.addf %164, %8 : vector<1x256xf32>
    %166 = vector.extract_strided_slice %165 {offsets = [0, 128], sizes = [1, 128], strides = [1, 1]} : vector<1x256xf32> to vector<1x128xf32>
    %167 = vector.extract_strided_slice %165 {offsets = [0, 0], sizes = [1, 128], strides = [1, 1]} : vector<1x256xf32> to vector<1x128xf32>
    %168 = tpu.concatenate %166, %167 in 1 : vector<1x128xf32>, vector<1x128xf32> -> vector<1x256xf32>
    %169 = arith.mulf %165, %129 : vector<1x256xf32>
    %170 = arith.mulf %165, %168 : vector<1x256xf32>
    %171 = vector.extract_strided_slice %170 {offsets = [0, 64], sizes = [1, 192], strides = [1, 1]} : vector<1x256xf32> to vector<1x192xf32>
    %172 = vector.extract_strided_slice %170 {offsets = [0, 0], sizes = [1, 64], strides = [1, 1]} : vector<1x256xf32> to vector<1x64xf32>
    %173 = tpu.concatenate %171, %172 in 1 : vector<1x192xf32>, vector<1x64xf32> -> vector<1x256xf32>
    %174 = arith.addf %169, %173 : vector<1x256xf32>
    %175 = math.tanh %174 : vector<1x256xf32>
    %176 = arith.mulf %168, %175 : vector<1x256xf32>
    %177 = vector.extract_strided_slice %176 {offsets = [0, 0], sizes = [1, 128], strides = [1, 1]} : vector<1x256xf32> to vector<1x128xf32>
    %178 = vector.extract_strided_slice %158 {offsets = [0, 256], sizes = [1, 128], strides = [1, 1]} : vector<1x384xf32> to vector<1x128xf32>
    %179 = arith.addf %178, %5 : vector<1x128xf32>
    %c0_28 = arith.constant 0 : index
    %c0_29 = arith.constant 0 : index
    %180 = vector.load %arg2[%c0_28, %c0_29] : memref<128x128xf32, #tpu.memory_space<vmem>>, vector<128x128xf32>
    %cst_30 = arith.constant dense<0.000000e+00> : vector<1x128xf32>
    %181 = tpu.matmul %177, %180, %cst_30 {dimension_numbers = #tpu.dot_dimension_numbers<[1], [0], [0], [1], [0, 0, 1, 1], [], []>} : vector<1x128xf32>, vector<128x128xf32>, vector<1x128xf32> -> vector<1x128xf32>
    %182 = arith.addf %179, %181 : vector<1x128xf32>
    %183 = arith.mulf %182, %7 : vector<1x128xf32>
    %184 = math.tanh %183 : vector<1x128xf32>
    %185 = arith.mulf %184, %7 : vector<1x128xf32>
    %186 = arith.addf %185, %9 : vector<1x128xf32>
    %187 = vector.extract_strided_slice %186 {offsets = [0, 64], sizes = [1, 64], strides = [1, 1]} : vector<1x128xf32> to vector<1x64xf32>
    %188 = vector.extract_strided_slice %186 {offsets = [0, 0], sizes = [1, 64], strides = [1, 1]} : vector<1x128xf32> to vector<1x64xf32>
    %189 = tpu.concatenate %187, %188 in 1 : vector<1x64xf32>, vector<1x64xf32> -> vector<1x128xf32>
    %190 = arith.mulf %186, %150 : vector<1x128xf32>
    %191 = arith.mulf %186, %189 : vector<1x128xf32>
    %192 = vector.extract_strided_slice %191 {offsets = [0, 32], sizes = [1, 96], strides = [1, 1]} : vector<1x128xf32> to vector<1x96xf32>
    %193 = vector.extract_strided_slice %191 {offsets = [0, 0], sizes = [1, 32], strides = [1, 1]} : vector<1x128xf32> to vector<1x32xf32>
    %194 = tpu.concatenate %192, %193 in 1 : vector<1x96xf32>, vector<1x32xf32> -> vector<1x128xf32>
    %195 = arith.addf %190, %194 : vector<1x128xf32>
    %196 = math.tanh %195 : vector<1x128xf32>
    %197 = arith.mulf %189, %196 : vector<1x128xf32>
    %198 = vector.extract_strided_slice %197 {offsets = [0, 64], sizes = [1, 64], strides = [1, 1]} : vector<1x128xf32> to vector<1x64xf32>
    %199 = vector.extract_strided_slice %197 {offsets = [0, 0], sizes = [1, 64], strides = [1, 1]} : vector<1x128xf32> to vector<1x64xf32>
    %200 = tpu.concatenate %198, %199 in 1 : vector<1x64xf32>, vector<1x64xf32> -> vector<1x128xf32>
    %201 = arith.select %12, %177, %200 : vector<1x128xi1>, vector<1x128xf32>
    %c0_31 = arith.constant 0 : index
    %c0_32 = arith.constant 0 : index
    %202 = vector.load %arg1[%c0_31, %c0_32] : memref<144x384xf32, #tpu.memory_space<vmem>>, vector<128x384xf32>
    %cst_33 = arith.constant dense<0.000000e+00> : vector<1x384xf32>
    %203 = tpu.matmul %201, %202, %cst_33 {dimension_numbers = #tpu.dot_dimension_numbers<[1], [0], [0], [1], [0, 0, 1, 1], [], []>} : vector<1x128xf32>, vector<128x384xf32>, vector<1x384xf32> -> vector<1x384xf32>
    %204 = vector.extract_strided_slice %18 {offsets = [4, 0], sizes = [1, 256], strides = [1, 1]} : vector<8x256xf32> to vector<1x256xf32>
    %205 = vector.extract_strided_slice %203 {offsets = [0, 0], sizes = [1, 256], strides = [1, 1]} : vector<1x384xf32> to vector<1x256xf32>
    %206 = arith.addf %204, %205 : vector<1x256xf32>
    %207 = arith.mulf %206, %6 : vector<1x256xf32>
    %208 = math.tanh %207 : vector<1x256xf32>
    %209 = arith.mulf %208, %6 : vector<1x256xf32>
    %210 = arith.addf %209, %8 : vector<1x256xf32>
    %211 = vector.extract_strided_slice %210 {offsets = [0, 128], sizes = [1, 128], strides = [1, 1]} : vector<1x256xf32> to vector<1x128xf32>
    %212 = vector.extract_strided_slice %210 {offsets = [0, 0], sizes = [1, 128], strides = [1, 1]} : vector<1x256xf32> to vector<1x128xf32>
    %213 = tpu.concatenate %211, %212 in 1 : vector<1x128xf32>, vector<1x128xf32> -> vector<1x256xf32>
    %214 = arith.mulf %210, %174 : vector<1x256xf32>
    %215 = arith.mulf %210, %213 : vector<1x256xf32>
    %216 = vector.extract_strided_slice %215 {offsets = [0, 64], sizes = [1, 192], strides = [1, 1]} : vector<1x256xf32> to vector<1x192xf32>
    %217 = vector.extract_strided_slice %215 {offsets = [0, 0], sizes = [1, 64], strides = [1, 1]} : vector<1x256xf32> to vector<1x64xf32>
    %218 = tpu.concatenate %216, %217 in 1 : vector<1x192xf32>, vector<1x64xf32> -> vector<1x256xf32>
    %219 = arith.addf %214, %218 : vector<1x256xf32>
    %220 = math.tanh %219 : vector<1x256xf32>
    %221 = arith.mulf %213, %220 : vector<1x256xf32>
    %222 = vector.extract_strided_slice %221 {offsets = [0, 0], sizes = [1, 128], strides = [1, 1]} : vector<1x256xf32> to vector<1x128xf32>
    %223 = vector.extract_strided_slice %203 {offsets = [0, 256], sizes = [1, 128], strides = [1, 1]} : vector<1x384xf32> to vector<1x128xf32>
    %224 = arith.addf %223, %5 : vector<1x128xf32>
    %c0_34 = arith.constant 0 : index
    %c0_35 = arith.constant 0 : index
    %225 = vector.load %arg2[%c0_34, %c0_35] : memref<128x128xf32, #tpu.memory_space<vmem>>, vector<128x128xf32>
    %cst_36 = arith.constant dense<0.000000e+00> : vector<1x128xf32>
    %226 = tpu.matmul %222, %225, %cst_36 {dimension_numbers = #tpu.dot_dimension_numbers<[1], [0], [0], [1], [0, 0, 1, 1], [], []>} : vector<1x128xf32>, vector<128x128xf32>, vector<1x128xf32> -> vector<1x128xf32>
    %227 = arith.addf %224, %226 : vector<1x128xf32>
    %228 = arith.mulf %227, %7 : vector<1x128xf32>
    %229 = math.tanh %228 : vector<1x128xf32>
    %230 = arith.mulf %229, %7 : vector<1x128xf32>
    %231 = arith.addf %230, %9 : vector<1x128xf32>
    %232 = vector.extract_strided_slice %231 {offsets = [0, 64], sizes = [1, 64], strides = [1, 1]} : vector<1x128xf32> to vector<1x64xf32>
    %233 = vector.extract_strided_slice %231 {offsets = [0, 0], sizes = [1, 64], strides = [1, 1]} : vector<1x128xf32> to vector<1x64xf32>
    %234 = tpu.concatenate %232, %233 in 1 : vector<1x64xf32>, vector<1x64xf32> -> vector<1x128xf32>
    %235 = arith.mulf %231, %195 : vector<1x128xf32>
    %236 = arith.mulf %231, %234 : vector<1x128xf32>
    %237 = vector.extract_strided_slice %236 {offsets = [0, 32], sizes = [1, 96], strides = [1, 1]} : vector<1x128xf32> to vector<1x96xf32>
    %238 = vector.extract_strided_slice %236 {offsets = [0, 0], sizes = [1, 32], strides = [1, 1]} : vector<1x128xf32> to vector<1x32xf32>
    %239 = tpu.concatenate %237, %238 in 1 : vector<1x96xf32>, vector<1x32xf32> -> vector<1x128xf32>
    %240 = arith.addf %235, %239 : vector<1x128xf32>
    %241 = math.tanh %240 : vector<1x128xf32>
    %242 = arith.mulf %234, %241 : vector<1x128xf32>
    %243 = vector.extract_strided_slice %242 {offsets = [0, 64], sizes = [1, 64], strides = [1, 1]} : vector<1x128xf32> to vector<1x64xf32>
    %244 = vector.extract_strided_slice %242 {offsets = [0, 0], sizes = [1, 64], strides = [1, 1]} : vector<1x128xf32> to vector<1x64xf32>
    %245 = tpu.concatenate %243, %244 in 1 : vector<1x64xf32>, vector<1x64xf32> -> vector<1x128xf32>
    %246 = arith.select %12, %222, %245 : vector<1x128xi1>, vector<1x128xf32>
    %c0_37 = arith.constant 0 : index
    %c0_38 = arith.constant 0 : index
    %247 = vector.load %arg1[%c0_37, %c0_38] : memref<144x384xf32, #tpu.memory_space<vmem>>, vector<128x384xf32>
    %cst_39 = arith.constant dense<0.000000e+00> : vector<1x384xf32>
    %248 = tpu.matmul %246, %247, %cst_39 {dimension_numbers = #tpu.dot_dimension_numbers<[1], [0], [0], [1], [0, 0, 1, 1], [], []>} : vector<1x128xf32>, vector<128x384xf32>, vector<1x384xf32> -> vector<1x384xf32>
    %249 = vector.extract_strided_slice %18 {offsets = [5, 0], sizes = [1, 256], strides = [1, 1]} : vector<8x256xf32> to vector<1x256xf32>
    %250 = vector.extract_strided_slice %248 {offsets = [0, 0], sizes = [1, 256], strides = [1, 1]} : vector<1x384xf32> to vector<1x256xf32>
    %251 = arith.addf %249, %250 : vector<1x256xf32>
    %252 = arith.mulf %251, %6 : vector<1x256xf32>
    %253 = math.tanh %252 : vector<1x256xf32>
    %254 = arith.mulf %253, %6 : vector<1x256xf32>
    %255 = arith.addf %254, %8 : vector<1x256xf32>
    %256 = vector.extract_strided_slice %255 {offsets = [0, 128], sizes = [1, 128], strides = [1, 1]} : vector<1x256xf32> to vector<1x128xf32>
    %257 = vector.extract_strided_slice %255 {offsets = [0, 0], sizes = [1, 128], strides = [1, 1]} : vector<1x256xf32> to vector<1x128xf32>
    %258 = tpu.concatenate %256, %257 in 1 : vector<1x128xf32>, vector<1x128xf32> -> vector<1x256xf32>
    %259 = arith.mulf %255, %219 : vector<1x256xf32>
    %260 = arith.mulf %255, %258 : vector<1x256xf32>
    %261 = vector.extract_strided_slice %260 {offsets = [0, 64], sizes = [1, 192], strides = [1, 1]} : vector<1x256xf32> to vector<1x192xf32>
    %262 = vector.extract_strided_slice %260 {offsets = [0, 0], sizes = [1, 64], strides = [1, 1]} : vector<1x256xf32> to vector<1x64xf32>
    %263 = tpu.concatenate %261, %262 in 1 : vector<1x192xf32>, vector<1x64xf32> -> vector<1x256xf32>
    %264 = arith.addf %259, %263 : vector<1x256xf32>
    %265 = math.tanh %264 : vector<1x256xf32>
    %266 = arith.mulf %258, %265 : vector<1x256xf32>
    %267 = vector.extract_strided_slice %266 {offsets = [0, 0], sizes = [1, 128], strides = [1, 1]} : vector<1x256xf32> to vector<1x128xf32>
    %268 = vector.extract_strided_slice %248 {offsets = [0, 256], sizes = [1, 128], strides = [1, 1]} : vector<1x384xf32> to vector<1x128xf32>
    %269 = arith.addf %268, %5 : vector<1x128xf32>
    %c0_40 = arith.constant 0 : index
    %c0_41 = arith.constant 0 : index
    %270 = vector.load %arg2[%c0_40, %c0_41] : memref<128x128xf32, #tpu.memory_space<vmem>>, vector<128x128xf32>
    %cst_42 = arith.constant dense<0.000000e+00> : vector<1x128xf32>
    %271 = tpu.matmul %267, %270, %cst_42 {dimension_numbers = #tpu.dot_dimension_numbers<[1], [0], [0], [1], [0, 0, 1, 1], [], []>} : vector<1x128xf32>, vector<128x128xf32>, vector<1x128xf32> -> vector<1x128xf32>
    %272 = arith.addf %269, %271 : vector<1x128xf32>
    %273 = arith.mulf %272, %7 : vector<1x128xf32>
    %274 = math.tanh %273 : vector<1x128xf32>
    %275 = arith.mulf %274, %7 : vector<1x128xf32>
    %276 = arith.addf %275, %9 : vector<1x128xf32>
    %277 = vector.extract_strided_slice %276 {offsets = [0, 64], sizes = [1, 64], strides = [1, 1]} : vector<1x128xf32> to vector<1x64xf32>
    %278 = vector.extract_strided_slice %276 {offsets = [0, 0], sizes = [1, 64], strides = [1, 1]} : vector<1x128xf32> to vector<1x64xf32>
    %279 = tpu.concatenate %277, %278 in 1 : vector<1x64xf32>, vector<1x64xf32> -> vector<1x128xf32>
    %280 = arith.mulf %276, %240 : vector<1x128xf32>
    %281 = arith.mulf %276, %279 : vector<1x128xf32>
    %282 = vector.extract_strided_slice %281 {offsets = [0, 32], sizes = [1, 96], strides = [1, 1]} : vector<1x128xf32> to vector<1x96xf32>
    %283 = vector.extract_strided_slice %281 {offsets = [0, 0], sizes = [1, 32], strides = [1, 1]} : vector<1x128xf32> to vector<1x32xf32>
    %284 = tpu.concatenate %282, %283 in 1 : vector<1x96xf32>, vector<1x32xf32> -> vector<1x128xf32>
    %285 = arith.addf %280, %284 : vector<1x128xf32>
    %286 = math.tanh %285 : vector<1x128xf32>
    %287 = arith.mulf %279, %286 : vector<1x128xf32>
    %288 = vector.extract_strided_slice %287 {offsets = [0, 64], sizes = [1, 64], strides = [1, 1]} : vector<1x128xf32> to vector<1x64xf32>
    %289 = vector.extract_strided_slice %287 {offsets = [0, 0], sizes = [1, 64], strides = [1, 1]} : vector<1x128xf32> to vector<1x64xf32>
    %290 = tpu.concatenate %288, %289 in 1 : vector<1x64xf32>, vector<1x64xf32> -> vector<1x128xf32>
    %291 = arith.select %12, %267, %290 : vector<1x128xi1>, vector<1x128xf32>
    %c0_43 = arith.constant 0 : index
    %c0_44 = arith.constant 0 : index
    %292 = vector.load %arg1[%c0_43, %c0_44] : memref<144x384xf32, #tpu.memory_space<vmem>>, vector<128x384xf32>
    %cst_45 = arith.constant dense<0.000000e+00> : vector<1x384xf32>
    %293 = tpu.matmul %291, %292, %cst_45 {dimension_numbers = #tpu.dot_dimension_numbers<[1], [0], [0], [1], [0, 0, 1, 1], [], []>} : vector<1x128xf32>, vector<128x384xf32>, vector<1x384xf32> -> vector<1x384xf32>
    %294 = vector.extract_strided_slice %18 {offsets = [6, 0], sizes = [1, 256], strides = [1, 1]} : vector<8x256xf32> to vector<1x256xf32>
    %295 = vector.extract_strided_slice %293 {offsets = [0, 0], sizes = [1, 256], strides = [1, 1]} : vector<1x384xf32> to vector<1x256xf32>
    %296 = arith.addf %294, %295 : vector<1x256xf32>
    %297 = arith.mulf %296, %6 : vector<1x256xf32>
    %298 = math.tanh %297 : vector<1x256xf32>
    %299 = arith.mulf %298, %6 : vector<1x256xf32>
    %300 = arith.addf %299, %8 : vector<1x256xf32>
    %301 = vector.extract_strided_slice %300 {offsets = [0, 128], sizes = [1, 128], strides = [1, 1]} : vector<1x256xf32> to vector<1x128xf32>
    %302 = vector.extract_strided_slice %300 {offsets = [0, 0], sizes = [1, 128], strides = [1, 1]} : vector<1x256xf32> to vector<1x128xf32>
    %303 = tpu.concatenate %301, %302 in 1 : vector<1x128xf32>, vector<1x128xf32> -> vector<1x256xf32>
    %304 = arith.mulf %300, %264 : vector<1x256xf32>
    %305 = arith.mulf %300, %303 : vector<1x256xf32>
    %306 = vector.extract_strided_slice %305 {offsets = [0, 64], sizes = [1, 192], strides = [1, 1]} : vector<1x256xf32> to vector<1x192xf32>
    %307 = vector.extract_strided_slice %305 {offsets = [0, 0], sizes = [1, 64], strides = [1, 1]} : vector<1x256xf32> to vector<1x64xf32>
    %308 = tpu.concatenate %306, %307 in 1 : vector<1x192xf32>, vector<1x64xf32> -> vector<1x256xf32>
    %309 = arith.addf %304, %308 : vector<1x256xf32>
    %310 = math.tanh %309 : vector<1x256xf32>
    %311 = arith.mulf %303, %310 : vector<1x256xf32>
    %312 = vector.extract_strided_slice %311 {offsets = [0, 0], sizes = [1, 128], strides = [1, 1]} : vector<1x256xf32> to vector<1x128xf32>
    %313 = vector.extract_strided_slice %293 {offsets = [0, 256], sizes = [1, 128], strides = [1, 1]} : vector<1x384xf32> to vector<1x128xf32>
    %314 = arith.addf %313, %5 : vector<1x128xf32>
    %c0_46 = arith.constant 0 : index
    %c0_47 = arith.constant 0 : index
    %315 = vector.load %arg2[%c0_46, %c0_47] : memref<128x128xf32, #tpu.memory_space<vmem>>, vector<128x128xf32>
    %cst_48 = arith.constant dense<0.000000e+00> : vector<1x128xf32>
    %316 = tpu.matmul %312, %315, %cst_48 {dimension_numbers = #tpu.dot_dimension_numbers<[1], [0], [0], [1], [0, 0, 1, 1], [], []>} : vector<1x128xf32>, vector<128x128xf32>, vector<1x128xf32> -> vector<1x128xf32>
    %317 = arith.addf %314, %316 : vector<1x128xf32>
    %318 = arith.mulf %317, %7 : vector<1x128xf32>
    %319 = math.tanh %318 : vector<1x128xf32>
    %320 = arith.mulf %319, %7 : vector<1x128xf32>
    %321 = arith.addf %320, %9 : vector<1x128xf32>
    %322 = vector.extract_strided_slice %321 {offsets = [0, 64], sizes = [1, 64], strides = [1, 1]} : vector<1x128xf32> to vector<1x64xf32>
    %323 = vector.extract_strided_slice %321 {offsets = [0, 0], sizes = [1, 64], strides = [1, 1]} : vector<1x128xf32> to vector<1x64xf32>
    %324 = tpu.concatenate %322, %323 in 1 : vector<1x64xf32>, vector<1x64xf32> -> vector<1x128xf32>
    %325 = arith.mulf %321, %285 : vector<1x128xf32>
    %326 = arith.mulf %321, %324 : vector<1x128xf32>
    %327 = vector.extract_strided_slice %326 {offsets = [0, 32], sizes = [1, 96], strides = [1, 1]} : vector<1x128xf32> to vector<1x96xf32>
    %328 = vector.extract_strided_slice %326 {offsets = [0, 0], sizes = [1, 32], strides = [1, 1]} : vector<1x128xf32> to vector<1x32xf32>
    %329 = tpu.concatenate %327, %328 in 1 : vector<1x96xf32>, vector<1x32xf32> -> vector<1x128xf32>
    %330 = arith.addf %325, %329 : vector<1x128xf32>
    %331 = math.tanh %330 : vector<1x128xf32>
    %332 = arith.mulf %324, %331 : vector<1x128xf32>
    %333 = vector.extract_strided_slice %332 {offsets = [0, 64], sizes = [1, 64], strides = [1, 1]} : vector<1x128xf32> to vector<1x64xf32>
    %334 = vector.extract_strided_slice %332 {offsets = [0, 0], sizes = [1, 64], strides = [1, 1]} : vector<1x128xf32> to vector<1x64xf32>
    %335 = tpu.concatenate %333, %334 in 1 : vector<1x64xf32>, vector<1x64xf32> -> vector<1x128xf32>
    %336 = arith.select %12, %312, %335 : vector<1x128xi1>, vector<1x128xf32>
    %c0_49 = arith.constant 0 : index
    %c0_50 = arith.constant 0 : index
    %337 = vector.load %arg1[%c0_49, %c0_50] : memref<144x384xf32, #tpu.memory_space<vmem>>, vector<128x384xf32>
    %cst_51 = arith.constant dense<0.000000e+00> : vector<1x384xf32>
    %338 = tpu.matmul %336, %337, %cst_51 {dimension_numbers = #tpu.dot_dimension_numbers<[1], [0], [0], [1], [0, 0, 1, 1], [], []>} : vector<1x128xf32>, vector<128x384xf32>, vector<1x384xf32> -> vector<1x384xf32>
    %339 = vector.extract_strided_slice %18 {offsets = [7, 0], sizes = [1, 256], strides = [1, 1]} : vector<8x256xf32> to vector<1x256xf32>
    %340 = vector.extract_strided_slice %338 {offsets = [0, 0], sizes = [1, 256], strides = [1, 1]} : vector<1x384xf32> to vector<1x256xf32>
    %341 = arith.addf %339, %340 : vector<1x256xf32>
    %342 = arith.mulf %341, %6 : vector<1x256xf32>
    %343 = math.tanh %342 : vector<1x256xf32>
    %344 = arith.mulf %343, %6 : vector<1x256xf32>
    %345 = arith.addf %344, %8 : vector<1x256xf32>
    %346 = vector.extract_strided_slice %345 {offsets = [0, 128], sizes = [1, 128], strides = [1, 1]} : vector<1x256xf32> to vector<1x128xf32>
    %347 = vector.extract_strided_slice %345 {offsets = [0, 0], sizes = [1, 128], strides = [1, 1]} : vector<1x256xf32> to vector<1x128xf32>
    %348 = tpu.concatenate %346, %347 in 1 : vector<1x128xf32>, vector<1x128xf32> -> vector<1x256xf32>
    %349 = arith.mulf %345, %309 : vector<1x256xf32>
    %350 = arith.mulf %345, %348 : vector<1x256xf32>
    %351 = vector.extract_strided_slice %350 {offsets = [0, 64], sizes = [1, 192], strides = [1, 1]} : vector<1x256xf32> to vector<1x192xf32>
    %352 = vector.extract_strided_slice %350 {offsets = [0, 0], sizes = [1, 64], strides = [1, 1]} : vector<1x256xf32> to vector<1x64xf32>
    %353 = tpu.concatenate %351, %352 in 1 : vector<1x192xf32>, vector<1x64xf32> -> vector<1x256xf32>
    %354 = arith.addf %349, %353 : vector<1x256xf32>
    %355 = math.tanh %354 : vector<1x256xf32>
    %356 = arith.mulf %348, %355 : vector<1x256xf32>
    %357 = vector.extract_strided_slice %356 {offsets = [0, 0], sizes = [1, 128], strides = [1, 1]} : vector<1x256xf32> to vector<1x128xf32>
    %358 = vector.extract_strided_slice %338 {offsets = [0, 256], sizes = [1, 128], strides = [1, 1]} : vector<1x384xf32> to vector<1x128xf32>
    %359 = arith.addf %358, %5 : vector<1x128xf32>
    %c0_52 = arith.constant 0 : index
    %c0_53 = arith.constant 0 : index
    %360 = vector.load %arg2[%c0_52, %c0_53] : memref<128x128xf32, #tpu.memory_space<vmem>>, vector<128x128xf32>
    %cst_54 = arith.constant dense<0.000000e+00> : vector<1x128xf32>
    %361 = tpu.matmul %357, %360, %cst_54 {dimension_numbers = #tpu.dot_dimension_numbers<[1], [0], [0], [1], [0, 0, 1, 1], [], []>} : vector<1x128xf32>, vector<128x128xf32>, vector<1x128xf32> -> vector<1x128xf32>
    %362 = arith.addf %359, %361 : vector<1x128xf32>
    %363 = arith.mulf %362, %7 : vector<1x128xf32>
    %364 = math.tanh %363 : vector<1x128xf32>
    %365 = arith.mulf %364, %7 : vector<1x128xf32>
    %366 = arith.addf %365, %9 : vector<1x128xf32>
    %367 = vector.extract_strided_slice %366 {offsets = [0, 64], sizes = [1, 64], strides = [1, 1]} : vector<1x128xf32> to vector<1x64xf32>
    %368 = vector.extract_strided_slice %366 {offsets = [0, 0], sizes = [1, 64], strides = [1, 1]} : vector<1x128xf32> to vector<1x64xf32>
    %369 = tpu.concatenate %367, %368 in 1 : vector<1x64xf32>, vector<1x64xf32> -> vector<1x128xf32>
    %370 = arith.mulf %366, %330 : vector<1x128xf32>
    %371 = arith.mulf %366, %369 : vector<1x128xf32>
    %372 = vector.extract_strided_slice %371 {offsets = [0, 32], sizes = [1, 96], strides = [1, 1]} : vector<1x128xf32> to vector<1x96xf32>
    %373 = vector.extract_strided_slice %371 {offsets = [0, 0], sizes = [1, 32], strides = [1, 1]} : vector<1x128xf32> to vector<1x32xf32>
    %374 = tpu.concatenate %372, %373 in 1 : vector<1x96xf32>, vector<1x32xf32> -> vector<1x128xf32>
    %375 = arith.addf %370, %374 : vector<1x128xf32>
    %376 = math.tanh %375 : vector<1x128xf32>
    %377 = arith.mulf %369, %376 : vector<1x128xf32>
    %c0_55 = arith.constant 0 : index
    %c0_56 = arith.constant 0 : index
    %378 = vector.load %arg3[%c0_55, %c0_56] : memref<1x128xf32, #tpu.memory_space<vmem>>, vector<1x128xf32>
    tpu.vector_store %arg3[%c0_55, %c0_56], %377 {strides = array<i32>} : memref<1x128xf32, #tpu.memory_space<vmem>>, vector<1x128xf32>,
    return
  }
}

</mosaic_0001>

<llo_original>
// kernel: tpu_custom_call.1
$region0: #{tpu_custom_call.1}
  #allocation0 [shape = 'u32[]', space=smem, size = 0x4, offset = 0x4, fixed_abs, tag = 'smem constant byte address 0x4 - core index']
  #allocation1 [shape = 'u32[144,128]{1,0:T(1,128)}', space=vmem, size = 0x12000, scoped, tag = 'internal scratch']
  %s0 = inlined_call_operand.vmem [shape: f32[8,1], index: 0, kind: input, shape index: {}]
  %s1 = inlined_call_operand.hbm [shape: f32[144,384], index: 1, kind: input, shape index: {}]
  %s2 = inlined_call_operand.hbm [shape: f32[128,128], index: 2, kind: input, shape index: {}]
  %s3 = inlined_call_operand.hbm [shape: f32[1,128], index: 3, kind: output, shape index: {}]
  %s4 = sld [smem:[#allocation0]]
  $region30: #{tpu_custom_call.1} parent=0
    _
  %s6 = ssub.s32 1, %s4
  %s7 = scalar_select 0, %s6, %s4
  $region1: #{tpu_custom_call.1} parent=0
    #allocation2 [shape = 'u8[221184]{0}', space=vmem, size = 0x36000, scoped, tag = 'input window, operand 1, single buffered']
    #allocation3 [shape = 's32[1]{0}', space=sflag, size = 0x4, scoped, tag = 'scoped memory for tpu_custom_call.1']
    #allocation4 [shape = 's32[1]{0}', space=sflag, size = 0x4, scoped, tag = 'scoped memory for tpu_custom_call.1']
    #allocation5 [shape = 'u8[65536]{0}', space=vmem, size = 0x10000, scoped, tag = 'input window, operand 2, single buffered']
    #allocation6 [shape = 's32[1]{0}', space=sflag, size = 0x4, scoped, tag = 'scoped memory for tpu_custom_call.1']
    #allocation7 [shape = 'u8[512]{0}', space=vmem, size = 0x400, scoped, tag = 'output window, operand 0, single buffered']
    %8 = vsyncpa [#allocation3], 0
    %9 = vsyncpa [#allocation6], 0
    %10 = vsyncpa [#allocation4], 0
    // Predicated region
    $region2: #{tpu_custom_call.1} parent=1 // pred_check
      _
    $region3: #{tpu_custom_call.1} parent=1 // pred_check_branch
      %12 = sbr.rel (0) target = $region5
    $region4: #{tpu_custom_call.1} parent=1 // pred_region
      _
    $region5: #{tpu_custom_call.1} parent=1 // pred_fallthru
      _
    // Predicated region
    $region6: #{tpu_custom_call.1} parent=1 // pred_check
      _
    $region7: #{tpu_custom_call.1} parent=1 // pred_check_branch
      %14 = sbr.rel (0) target = $region9
    $region8: #{tpu_custom_call.1} parent=1 // pred_region
      %s16 = ssub.s32 6912, 6912
      %17 = vsyncadd [#allocation3], %s16
      %s18 = sshll.u32 [#allocation2], 4
      %s19 = int_to_ptr.vmem [resolvable:$true] %s18
      %24 = dma.hbm_to_vmem [thread:$0]  %s1, 6912, %s19, [#allocation3], 384, 384, 24
    $region9: #{tpu_custom_call.1} parent=1 // pred_fallthru
      _
    // Predicated region
    $region10: #{tpu_custom_call.1} parent=1 // pred_check
      _
    $region11: #{tpu_custom_call.1} parent=1 // pred_check_branch
      %26 = sbr.rel (0) target = $region13
    $region12: #{tpu_custom_call.1} parent=1 // pred_region
      %s28 = ssub.s32 2048, 2048
      %29 = vsyncadd [#allocation6], %s28
      %s30 = sshll.u32 [#allocation5], 4
      %s31 = int_to_ptr.vmem [resolvable:$true] %s30
      %36 = dma.hbm_to_vmem [thread:$0]  %s2, 2048, %s31, [#allocation6], 128, 128, 8
    $region13: #{tpu_custom_call.1} parent=1 // pred_fallthru
      _
    // Predicated region
    $region14: #{tpu_custom_call.1} parent=1 // pred_check
      _
    $region15: #{tpu_custom_call.1} parent=1 // pred_check_branch
      %38 = sbr.rel (0) target = $region17
    $region16: #{tpu_custom_call.1} parent=1 // pred_region
      %39 = dma.done [#allocation3], 6912
    $region17: #{tpu_custom_call.1} parent=1 // pred_fallthru
      _
    // Predicated region
    $region18: #{tpu_custom_call.1} parent=1 // pred_check
      _
    $region19: #{tpu_custom_call.1} parent=1 // pred_check_branch
      %41 = sbr.rel (0) target = $region21
    $region20: #{tpu_custom_call.1} parent=1 // pred_region
      %42 = dma.done [#allocation6], 2048
    $region21: #{tpu_custom_call.1} parent=1 // pred_fallthru
      _
    %s43 = scalar_lea.vmem [#allocation2], 384
    %v44 = vld [vmem:[%s43] ss:$8 sm:$0x3]
    %s45 = scalar_lea.vmem [#allocation2], 408
    %v46 = vld [vmem:[%s45] ss:$8 sm:$0x7]
    %s47 = scalar_lea.vmem [#allocation2], 409
    %v48 = vld [vmem:[%s47] ss:$8 sm:$0x7]
    %s49 = scalar_lea.vmem [#allocation2], 410
    %v50 = vld [vmem:[%s49] ss:$8 sm:$0x7]
    %v51 = vlaneseq
    %v52 = vand.u32 %v51, 127
    %vm53 = vcmp.lt.s32.totalorder %v52, 64
    %v54 = vld [vmem:[%s0] sm:$0xff]
    %56 = vset.pattern.permute.xlu0 0
    %57 = vperm.xlu0 %56, %v54
    %v58 = vpop.permute.xlu0 %57
    %v61 = vlaneseq
    %v62 = vshrl.u32 %v61, 7
    %v63 = vsub.s32 0, %v62
    %v64 = vrot.slane %v44, %v63
    %v65 = vlaneseq
    %v66 = vshrl.u32 %v65, 7
    %v67 = vsub.s32 1, %v66
    %v68 = vrot.slane %v44, %v67
    %v71 = vmul.f32 %v58, %v64
    %v72 = vmul.f32 %v58, %v68
    %v74 = vlaneseq
    %v75 = vshrl.u32 %v74, 7
    %v76 = vsub.s32 0, %v75
    %v77 = vrot.slane %v46, %v76
    %v78 = vlaneseq
    %v79 = vshrl.u32 %v78, 7
    %v80 = vsub.s32 1, %v79
    %v81 = vrot.slane %v46, %v80
    %v84 = vadd.f32 %v71, %v77
    %v85 = vadd.f32 %v72, %v81
    %v86 = vld [vmem:[#allocation2] sm:$0xff]
    %v87 = vld [vmem:[#allocation2 + $0x8] sm:$0xff]
    %v88 = vld [vmem:[#allocation2 + $0x10] sm:$0xff]
    %v89 = vld [vmem:[#allocation2 + $0x18] sm:$0xff]
    %v90 = vld [vmem:[#allocation2 + $0x20] sm:$0xff]
    %v91 = vld [vmem:[#allocation2 + $0x28] sm:$0xff]
    %v92 = vld [vmem:[#allocation2 + $0x30] sm:$0xff]
    %v93 = vld [vmem:[#allocation2 + $0x38] sm:$0xff]
    %v94 = vld [vmem:[#allocation2 + $0x40] sm:$0xff]
    %v95 = vld [vmem:[#allocation2 + $0x48] sm:$0xff]
    %v96 = vld [vmem:[#allocation2 + $0x50] sm:$0xff]
    %v97 = vld [vmem:[#allocation2 + $0x58] sm:$0xff]
    %v98 = vld [vmem:[#allocation2 + $0x60] sm:$0xff]
    %v99 = vld [vmem:[#allocation2 + $0x68] sm:$0xff]
    %v100 = vld [vmem:[#allocation2 + $0x70] sm:$0xff]
    %v101 = vld [vmem:[#allocation2 + $0x78] sm:$0xff]
    %v102 = vld [vmem:[#allocation2 + $0x80] sm:$0xff]
    %v103 = vld [vmem:[#allocation2 + $0x88] sm:$0xff]
    %v104 = vld [vmem:[#allocation2 + $0x90] sm:$0xff]
    %v105 = vld [vmem:[#allocation2 + $0x98] sm:$0xff]
    %v106 = vld [vmem:[#allocation2 + $0xa0] sm:$0xff]
    %v107 = vld [vmem:[#allocation2 + $0xa8] sm:$0xff]
    %v108 = vld [vmem:[#allocation2 + $0xb0] sm:$0xff]
    %v109 = vld [vmem:[#allocation2 + $0xb8] sm:$0xff]
    %v110 = vld [vmem:[#allocation2 + $0xc0] sm:$0xff]
    %v111 = vld [vmem:[#allocation2 + $0xc8] sm:$0xff]
    %v112 = vld [vmem:[#allocation2 + $0xd0] sm:$0xff]
    %v113 = vld [vmem:[#allocation2 + $0xd8] sm:$0xff]
    %v114 = vld [vmem:[#allocation2 + $0xe0] sm:$0xff]
    %v115 = vld [vmem:[#allocation2 + $0xe8] sm:$0xff]
    %v116 = vld [vmem:[#allocation2 + $0xf0] sm:$0xff]
    %v117 = vld [vmem:[#allocation2 + $0xf8] sm:$0xff]
    %v118 = vld [vmem:[#allocation2 + $0x100] sm:$0xff]
    %v119 = vld [vmem:[#allocation2 + $0x108] sm:$0xff]
    %v120 = vld [vmem:[#allocation2 + $0x110] sm:$0xff]
    %v121 = vld [vmem:[#allocation2 + $0x118] sm:$0xff]
    %v122 = vld [vmem:[#allocation2 + $0x120] sm:$0xff]
    %v123 = vld [vmem:[#allocation2 + $0x128] sm:$0xff]
    %v124 = vld [vmem:[#allocation2 + $0x130] sm:$0xff]
    %v125 = vld [vmem:[#allocation2 + $0x138] sm:$0xff]
    %v126 = vld [vmem:[#allocation2 + $0x140] sm:$0xff]
    %v127 = vld [vmem:[#allocation2 + $0x148] sm:$0xff]
    %v128 = vld [vmem:[#allocation2 + $0x150] sm:$0xff]
    %v129 = vld [vmem:[#allocation2 + $0x158] sm:$0xff]
    %v130 = vld [vmem:[#allocation2 + $0x160] sm:$0xff]
    %v131 = vld [vmem:[#allocation2 + $0x168] sm:$0xff]
    %v132 = vld [vmem:[#allocation2 + $0x170] sm:$0xff]
    %v133 = vld [vmem:[#allocation2 + $0x178] sm:$0xff]
    %134 = vmatprep.subr.mxu0 %v132
    %135 = vmatpush1.msra.mxu0 %v131
    %136 = vmatprep.subr.mxu0 %v129
    %137 = vmatpush1.msra.mxu0 %v128
    %138 = vmatprep.subr.mxu0 %v126
    %139 = vmatpush1.msra.mxu0 %v125
    %140 = vmatprep.subr.mxu0 %v123
    %141 = vmatpush1.msra.mxu0 %v122
    %142 = vmatprep.subr.mxu0 %v120
    %143 = vmatpush1.msra.mxu0 %v119
    %144 = vmatprep.subr.mxu0 %v117
    %145 = vmatpush1.msra.mxu0 %v116
    %146 = vmatprep.subr.mxu0 %v114
    %147 = vmatpush1.msra.mxu0 %v113
    %148 = vmatprep.subr.mxu0 %v111
    %149 = vmatpush1.msra.mxu0 %v110
    %150 = vmatprep.subr.mxu0 %v108
    %151 = vmatpush1.msra.mxu0 %v107
    %152 = vmatprep.subr.mxu0 %v105
    %153 = vmatpush1.msra.mxu0 %v104
    %154 = vmatprep.subr.mxu0 %v102
    %155 = vmatpush1.msra.mxu0 %v101
    %156 = vmatprep.subr.mxu0 %v99
    %157 = vmatpush1.msra.mxu0 %v98
    %158 = vmatprep.subr.mxu0 %v96
    %159 = vmatpush1.msra.mxu0 %v95
    %160 = vmatprep.subr.mxu0 %v93
    %161 = vmatpush1.msra.mxu0 %v92
    %162 = vmatprep.subr.mxu0 %v90
    %163 = vmatpush1.msra.mxu0 %v89
    %164 = vmatprep.subr.mxu0 %v87
    %165 = vmatpush1.msra.mxu0 %v86
    %166 = vmatprep.subr.mxu0 0.0
    %167 = vmatpush2.msra.mxu0 0.0
    %168 = vmatprep.subr.mxu0 0.0
    %169 = vmatpush2.msra.mxu0 0.0
    %170 = vmatprep.subr.mxu0 0.0
    %171 = vmatpush2.msra.mxu0 0.0
    %172 = vmatprep.subr.mxu0 0.0
    %173 = vmatpush2.msra.mxu0 0.0
    %174 = vmatprep.subr.mxu0 0.0
    %175 = vmatpush2.msra.mxu0 0.0
    %176 = vmatprep.subr.mxu0 0.0
    %177 = vmatpush2.msra.mxu0 0.0
    %178 = vmatprep.subr.mxu0 0.0
    %179 = vmatpush2.msra.mxu0 0.0
    %180 = vmatprep.subr.mxu0 0.0
    %181 = vmatpush2.msra.mxu0 0.0
    %182 = vmatprep.subr.mxu0 0.0
    %183 = vmatpush2.msra.mxu0 0.0
    %184 = vmatprep.subr.mxu0 0.0
    %185 = vmatpush2.msra.mxu0 0.0
    %186 = vmatprep.subr.mxu0 0.0
    %187 = vmatpush2.msra.mxu0 0.0
    %188 = vmatprep.subr.mxu0 0.0
    %189 = vmatpush2.msra.mxu0 0.0
    %190 = vmatprep.subr.mxu0 0.0
    %191 = vmatpush2.msra.mxu0 0.0
    %192 = vmatprep.subr.mxu0 0.0
    %193 = vmatpush2.msra.mxu0 0.0
    %194 = vmatprep.subr.mxu0 0.0
    %195 = vmatpush2.msra.mxu0 0.0
    %196 = vmatprep.subr.mxu0 0.0
    %197 = vmatpush2.msra.mxu0 0.0
    %198 = vmatprep.mubr.f32.mxu0 0.0
    %199 = vmatmul.mubr.f32.gmra.mxu0 0.0
    %v200 = vpop.f32.mrf.mxu0
    %v201 = vadd.f32 0.0, %v200
    %v202 = vpop.f32.mrf.mxu0
    %v203 = vadd.f32 0.0, %v202
    %204 = vdwg.mxu0
    %205 = vmatprep.subr.mxu0 0.0
    %206 = vmatpush1.msra.mxu0 %v133
    %207 = vmatprep.subr.mxu0 0.0
    %208 = vmatpush1.msra.mxu0 %v130
    %209 = vmatprep.subr.mxu0 0.0
    %210 = vmatpush1.msra.mxu0 %v127
    %211 = vmatprep.subr.mxu0 0.0
    %212 = vmatpush1.msra.mxu0 %v124
    %213 = vmatprep.subr.mxu0 0.0
    %214 = vmatpush1.msra.mxu0 %v121
    %215 = vmatprep.subr.mxu0 0.0
    %216 = vmatpush1.msra.mxu0 %v118
    %217 = vmatprep.subr.mxu0 0.0
    %218 = vmatpush1.msra.mxu0 %v115
    %219 = vmatprep.subr.mxu0 0.0
    %220 = vmatpush1.msra.mxu0 %v112
    %221 = vmatprep.subr.mxu0 0.0
    %222 = vmatpush1.msra.mxu0 %v109
    %223 = vmatprep.subr.mxu0 0.0
    %224 = vmatpush1.msra.mxu0 %v106
    %225 = vmatprep.subr.mxu0 0.0
    %226 = vmatpush1.msra.mxu0 %v103
    %227 = vmatprep.subr.mxu0 0.0
    %228 = vmatpush1.msra.mxu0 %v100
    %229 = vmatprep.subr.mxu0 0.0
    %230 = vmatpush1.msra.mxu0 %v97
    %231 = vmatprep.subr.mxu0 0.0
    %232 = vmatpush1.msra.mxu0 %v94
    %233 = vmatprep.subr.mxu0 0.0
    %234 = vmatpush1.msra.mxu0 %v91
    %235 = vmatprep.subr.mxu0 0.0
    %236 = vmatpush1.msra.mxu0 %v88
    %237 = vmatprep.subr.mxu0 0.0
    %238 = vmatpush2.msra.mxu0 0.0
    %239 = vmatprep.subr.mxu0 0.0
    %240 = vmatpush2.msra.mxu0 0.0
    %241 = vmatprep.subr.mxu0 0.0
    %242 = vmatpush2.msra.mxu0 0.0
    %243 = vmatprep.subr.mxu0 0.0
    %244 = vmatpush2.msra.mxu0 0.0
    %245 = vmatprep.subr.mxu0 0.0
    %246 = vmatpush2.msra.mxu0 0.0
    %247 = vmatprep.subr.mxu0 0.0
    %248 = vmatpush2.msra.mxu0 0.0
    %249 = vmatprep.subr.mxu0 0.0
    %250 = vmatpush2.msra.mxu0 0.0
    %251 = vmatprep.subr.mxu0 0.0
    %252 = vmatpush2.msra.mxu0 0.0
    %253 = vmatprep.subr.mxu0 0.0
    %254 = vmatpush2.msra.mxu0 0.0
    %255 = vmatprep.subr.mxu0 0.0
    %256 = vmatpush2.msra.mxu0 0.0
    %257 = vmatprep.subr.mxu0 0.0
    %258 = vmatpush2.msra.mxu0 0.0
    %259 = vmatprep.subr.mxu0 0.0
    %260 = vmatpush2.msra.mxu0 0.0
    %261 = vmatprep.subr.mxu0 0.0
    %262 = vmatpush2.msra.mxu0 0.0
    %263 = vmatprep.subr.mxu0 0.0
    %264 = vmatpush2.msra.mxu0 0.0
    %265 = vmatprep.subr.mxu0 0.0
    %266 = vmatpush2.msra.mxu0 0.0
    %267 = vmatprep.subr.mxu0 0.0
    %268 = vmatpush2.msra.mxu0 0.0
    %269 = vmatprep.mubr.f32.mxu0 0.0
    %270 = vmatmul.mubr.f32.gmra.mxu0 0.0
    %v271 = vpop.f32.mrf.mxu0
    %v272 = vadd.f32 0.0, %v271
    %v273 = vpop.f32.mrf.mxu0
    %274 = vdwg.mxu0
    %v275 = vadd.f32 %v84, %v201
    %v276 = vadd.f32 %v85, %v203
    %v278 = vlaneseq
    %v279 = vshrl.u32 %v278, 7
    %v280 = vsub.s32 0, %v279
    %v281 = vrot.slane %v48, %v280
    %v282 = vlaneseq
    %v283 = vshrl.u32 %v282, 7
    %v284 = vsub.s32 1, %v283
    %v285 = vrot.slane %v48, %v284
    %v288 = vmul.f32 %v275, %v281
    %v289 = vmul.f32 %v276, %v285
    %v290 = vtanh.pop %v288
    %v291 = vtanh.pop %v289
    %v292 = vmul.f32 %v290, %v281
    %v293 = vmul.f32 %v291, %v285
    %v295 = vlaneseq
    %v296 = vshrl.u32 %v295, 7
    %v297 = vsub.s32 0, %v296
    %v298 = vrot.slane %v50, %v297
    %v299 = vlaneseq
    %v300 = vshrl.u32 %v299, 7
    %v301 = vsub.s32 1, %v300
    %v302 = vrot.slane %v50, %v301
    %v305 = vadd.f32 %v292, %v298
    %v306 = vadd.f32 %v293, %v302
    %v307 = vmul.f32 %v305, 0.0
    %v308 = vmul.f32 %v305, %v306
    %310 = vrot.lane.b32.xlu0 %v308, 64
    %v311 = vpop.permute.xlu0 %310
    %v313 = vadd.f32 %v307, %v311
    %v314 = vtanh.pop %v313
    %v315 = vmul.f32 %v306, %v314
    %v316 = vlaneseq
    %v317 = vshrl.u32 %v316, 7
    %v318 = vsub.s32 2, %v317
    %v319 = vrot.slane %v46, %v318
    %v321 = vadd.f32 %v272, %v319
    %v322 = vld [vmem:[#allocation5] sm:$0xff]
    %v323 = vld [vmem:[#allocation5 + $0x8] sm:$0xff]
    %v324 = vld [vmem:[#allocation5 + $0x10] sm:$0xff]
    %v325 = vld [vmem:[#allocation5 + $0x18] sm:$0xff]
    %v326 = vld [vmem:[#allocation5 + $0x20] sm:$0xff]
    %v327 = vld [vmem:[#allocation5 + $0x28] sm:$0xff]
    %v328 = vld [vmem:[#allocation5 + $0x30] sm:$0xff]
    %v329 = vld [vmem:[#allocation5 + $0x38] sm:$0xff]
    %v330 = vld [vmem:[#allocation5 + $0x40] sm:$0xff]
    %v331 = vld [vmem:[#allocation5 + $0x48] sm:$0xff]
    %v332 = vld [vmem:[#allocation5 + $0x50] sm:$0xff]
    %v333 = vld [vmem:[#allocation5 + $0x58] sm:$0xff]
    %v334 = vld [vmem:[#allocation5 + $0x60] sm:$0xff]
    %v335 = vld [vmem:[#allocation5 + $0x68] sm:$0xff]
    %v336 = vld [vmem:[#allocation5 + $0x70] sm:$0xff]
    %v337 = vld [vmem:[#allocation5 + $0x78] sm:$0xff]
    %338 = vmatprep.subr.mxu0 0.0
    %339 = vmatpush1.msra.mxu0 %v337
    %340 = vmatprep.subr.mxu0 0.0
    %341 = vmatpush1.msra.mxu0 %v336
    %342 = vmatprep.subr.mxu0 0.0
    %343 = vmatpush1.msra.mxu0 %v335
    %344 = vmatprep.subr.mxu0 0.0
    %345 = vmatpush1.msra.mxu0 %v334
    %346 = vmatprep.subr.mxu0 0.0
    %347 = vmatpush1.msra.mxu0 %v333
    %348 = vmatprep.subr.mxu0 0.0
    %349 = vmatpush1.msra.mxu0 %v332
    %350 = vmatprep.subr.mxu0 0.0
    %351 = vmatpush1.msra.mxu0 %v331
    %352 = vmatprep.subr.mxu0 0.0
    %353 = vmatpush1.msra.mxu0 %v330
    %354 = vmatprep.subr.mxu0 0.0
    %355 = vmatpush1.msra.mxu0 %v329
    %356 = vmatprep.subr.mxu0 0.0
    %357 = vmatpush1.msra.mxu0 %v328
    %358 = vmatprep.subr.mxu0 0.0
    %359 = vmatpush1.msra.mxu0 %v327
    %360 = vmatprep.subr.mxu0 0.0
    %361 = vmatpush1.msra.mxu0 %v326
    %362 = vmatprep.subr.mxu0 0.0
    %363 = vmatpush1.msra.mxu0 %v325
    %364 = vmatprep.subr.mxu0 0.0
    %365 = vmatpush1.msra.mxu0 %v324
    %366 = vmatprep.subr.mxu0 0.0
    %367 = vmatpush1.msra.mxu0 %v323
    %368 = vmatprep.subr.mxu0 0.0
    %369 = vmatpush1.msra.mxu0 %v322
    %370 = vmatprep.subr.mxu0 0.0
    %371 = vmatpush2.msra.mxu0 0.0
    %372 = vmatprep.subr.mxu0 0.0
    %373 = vmatpush2.msra.mxu0 0.0
    %374 = vmatprep.subr.mxu0 0.0
    %375 = vmatpush2.msra.mxu0 0.0
    %376 = vmatprep.subr.mxu0 0.0
    %377 = vmatpush2.msra.mxu0 0.0
    %378 = vmatprep.subr.mxu0 0.0
    %379 = vmatpush2.msra.mxu0 0.0
    %380 = vmatprep.subr.mxu0 0.0
    %381 = vmatpush2.msra.mxu0 0.0
    %382 = vmatprep.subr.mxu0 0.0
    %383 = vmatpush2.msra.mxu0 0.0
    %384 = vmatprep.subr.mxu0 0.0
    %385 = vmatpush2.msra.mxu0 0.0
    %386 = vmatprep.subr.mxu0 0.0
    %387 = vmatpush2.msra.mxu0 0.0
    %388 = vmatprep.subr.mxu0 0.0
    %389 = vmatpush2.msra.mxu0 0.0
    %390 = vmatprep.subr.mxu0 0.0
    %391 = vmatpush2.msra.mxu0 0.0
    %392 = vmatprep.subr.mxu0 0.0
    %393 = vmatpush2.msra.mxu0 0.0
    %394 = vmatprep.subr.mxu0 0.0
    %395 = vmatpush2.msra.mxu0 0.0
    %396 = vmatprep.subr.mxu0 0.0
    %397 = vmatpush2.msra.mxu0 0.0
    %398 = vmatprep.subr.mxu0 0.0
    %399 = vmatpush2.msra.mxu0 0.0
    %400 = vmatprep.subr.mxu0 0.0
    %401 = vmatpush2.msra.mxu0 0.0
    %402 = vmatprep.mubr.f32.mxu0 0.0
    %403 = vmatmul.mubr.f32.gmra.mxu0 %v315
    %v404 = vpop.f32.mrf.mxu0
    %v405 = vadd.f32 0.0, %v404
    %v406 = vpop.f32.mrf.mxu0
    %407 = vdwg.mxu0
    %v408 = vadd.f32 %v321, %v405
    %v409 = vlaneseq
    %v410 = vshrl.u32 %v409, 7
    %v411 = vsub.s32 2, %v410
    %v412 = vrot.slane %v48, %v411
    %v414 = vmul.f32 %v408, %v412
    %v415 = vtanh.pop %v414
    %v416 = vmul.f32 %v415, %v412
    %v417 = vlaneseq
    %v418 = vshrl.u32 %v417, 7
    %v419 = vsub.s32 2, %v418
    %v420 = vrot.slane %v50, %v419
    %v422 = vadd.f32 %v416, %v420
    %424 = vrot.lane.b32.xlu0 %v422, 64
    %v425 = vpop.permute.xlu0 %424
    %v427 = vmul.f32 %v422, 0.0
    %v428 = vmul.f32 %v422, %v425
    %430 = vrot.lane.b32.xlu0 %v428, 96
    %v431 = vpop.permute.xlu0 %430
    %v433 = vadd.f32 %v427, %v431
    %v434 = vtanh.pop %v433
    %v435 = vmul.f32 %v425, %v434
    %437 = vrot.lane.b32.xlu0 %v435, 64
    %v438 = vpop.permute.xlu0 %437
    %v440 = vsel %vm53, %v315, %v438
    %441 = vmatprep.subr.mxu0 %v132
    %442 = vmatpush1.msra.mxu0 %v131
    %443 = vmatprep.subr.mxu0 %v129
    %444 = vmatpush1.msra.mxu0 %v128
    %445 = vmatprep.subr.mxu0 %v126
    %446 = vmatpush1.msra.mxu0 %v125
    %447 = vmatprep.subr.mxu0 %v123
    %448 = vmatpush1.msra.mxu0 %v122
    %449 = vmatprep.subr.mxu0 %v120
    %450 = vmatpush1.msra.mxu0 %v119
    %451 = vmatprep.subr.mxu0 %v117
    %452 = vmatpush1.msra.mxu0 %v116
    %453 = vmatprep.subr.mxu0 %v114
    %454 = vmatpush1.msra.mxu0 %v113
    %455 = vmatprep.subr.mxu0 %v111
    %456 = vmatpush1.msra.mxu0 %v110
    %457 = vmatprep.subr.mxu0 %v108
    %458 = vmatpush1.msra.mxu0 %v107
    %459 = vmatprep.subr.mxu0 %v105
    %460 = vmatpush1.msra.mxu0 %v104
    %461 = vmatprep.subr.mxu0 %v102
    %462 = vmatpush1.msra.mxu0 %v101
    %463 = vmatprep.subr.mxu0 %v99
    %464 = vmatpush1.msra.mxu0 %v98
    %465 = vmatprep.subr.mxu0 %v96
    %466 = vmatpush1.msra.mxu0 %v95
    %467 = vmatprep.subr.mxu0 %v93
    %468 = vmatpush1.msra.mxu0 %v92
    %469 = vmatprep.subr.mxu0 %v90
    %470 = vmatpush1.msra.mxu0 %v89
    %471 = vmatprep.subr.mxu0 %v87
    %472 = vmatpush1.msra.mxu0 %v86
    %473 = vmatprep.subr.mxu0 0.0
    %474 = vmatpush2.msra.mxu0 0.0
    %475 = vmatprep.subr.mxu0 0.0
    %476 = vmatpush2.msra.mxu0 0.0
    %477 = vmatprep.subr.mxu0 0.0
    %478 = vmatpush2.msra.mxu0 0.0
    %479 = vmatprep.subr.mxu0 0.0
    %480 = vmatpush2.msra.mxu0 0.0
    %481 = vmatprep.subr.mxu0 0.0
    %482 = vmatpush2.msra.mxu0 0.0
    %483 = vmatprep.subr.mxu0 0.0
    %484 = vmatpush2.msra.mxu0 0.0
    %485 = vmatprep.subr.mxu0 0.0
    %486 = vmatpush2.msra.mxu0 0.0
    %487 = vmatprep.subr.mxu0 0.0
    %488 = vmatpush2.msra.mxu0 0.0
    %489 = vmatprep.subr.mxu0 0.0
    %490 = vmatpush2.msra.mxu0 0.0
    %491 = vmatprep.subr.mxu0 0.0
    %492 = vmatpush2.msra.mxu0 0.0
    %493 = vmatprep.subr.mxu0 0.0
    %494 = vmatpush2.msra.mxu0 0.0
    %495 = vmatprep.subr.mxu0 0.0
    %496 = vmatpush2.msra.mxu0 0.0
    %497 = vmatprep.subr.mxu0 0.0
    %498 = vmatpush2.msra.mxu0 0.0
    %499 = vmatprep.subr.mxu0 0.0
    %500 = vmatpush2.msra.mxu0 0.0
    %501 = vmatprep.subr.mxu0 0.0
    %502 = vmatpush2.msra.mxu0 0.0
    %503 = vmatprep.subr.mxu0 0.0
    %504 = vmatpush2.msra.mxu0 0.0
    %505 = vmatprep.mubr.f32.mxu0 0.0
    %506 = vmatmul.mubr.f32.gmra.mxu0 %v440
    %v507 = vpop.f32.mrf.mxu0
    %v508 = vadd.f32 0.0, %v507
    %v509 = vpop.f32.mrf.mxu0
    %v510 = vadd.f32 0.0, %v509
    %511 = vdwg.mxu0
    %512 = vmatprep.subr.mxu0 0.0
    %513 = vmatpush1.msra.mxu0 %v133
    %514 = vmatprep.subr.mxu0 0.0
    %515 = vmatpush1.msra.mxu0 %v130
    %516 = vmatprep.subr.mxu0 0.0
    %517 = vmatpush1.msra.mxu0 %v127
    %518 = vmatprep.subr.mxu0 0.0
    %519 = vmatpush1.msra.mxu0 %v124
    %520 = vmatprep.subr.mxu0 0.0
    %521 = vmatpush1.msra.mxu0 %v121
    %522 = vmatprep.subr.mxu0 0.0
    %523 = vmatpush1.msra.mxu0 %v118
    %524 = vmatprep.subr.mxu0 0.0
    %525 = vmatpush1.msra.mxu0 %v115
    %526 = vmatprep.subr.mxu0 0.0
    %527 = vmatpush1.msra.mxu0 %v112
    %528 = vmatprep.subr.mxu0 0.0
    %529 = vmatpush1.msra.mxu0 %v109
    %530 = vmatprep.subr.mxu0 0.0
    %531 = vmatpush1.msra.mxu0 %v106
    %532 = vmatprep.subr.mxu0 0.0
    %533 = vmatpush1.msra.mxu0 %v103
    %534 = vmatprep.subr.mxu0 0.0
    %535 = vmatpush1.msra.mxu0 %v100
    %536 = vmatprep.subr.mxu0 0.0
    %537 = vmatpush1.msra.mxu0 %v97
    %538 = vmatprep.subr.mxu0 0.0
    %539 = vmatpush1.msra.mxu0 %v94
    %540 = vmatprep.subr.mxu0 0.0
    %541 = vmatpush1.msra.mxu0 %v91
    %542 = vmatprep.subr.mxu0 0.0
    %543 = vmatpush1.msra.mxu0 %v88
    %544 = vmatprep.subr.mxu0 0.0
    %545 = vmatpush2.msra.mxu0 0.0
    %546 = vmatprep.subr.mxu0 0.0
    %547 = vmatpush2.msra.mxu0 0.0
    %548 = vmatprep.subr.mxu0 0.0
    %549 = vmatpush2.msra.mxu0 0.0
    %550 = vmatprep.subr.mxu0 0.0
    %551 = vmatpush2.msra.mxu0 0.0
    %552 = vmatprep.subr.mxu0 0.0
    %553 = vmatpush2.msra.mxu0 0.0
    %554 = vmatprep.subr.mxu0 0.0
    %555 = vmatpush2.msra.mxu0 0.0
    %556 = vmatprep.subr.mxu0 0.0
    %557 = vmatpush2.msra.mxu0 0.0
    %558 = vmatprep.subr.mxu0 0.0
    %559 = vmatpush2.msra.mxu0 0.0
    %560 = vmatprep.subr.mxu0 0.0
    %561 = vmatpush2.msra.mxu0 0.0
    %562 = vmatprep.subr.mxu0 0.0
    %563 = vmatpush2.msra.mxu0 0.0
    %564 = vmatprep.subr.mxu0 0.0
    %565 = vmatpush2.msra.mxu0 0.0
    %566 = vmatprep.subr.mxu0 0.0
    %567 = vmatpush2.msra.mxu0 0.0
    %568 = vmatprep.subr.mxu0 0.0
    %569 = vmatpush2.msra.mxu0 0.0
    %570 = vmatprep.subr.mxu0 0.0
    %571 = vmatpush2.msra.mxu0 0.0
    %572 = vmatprep.subr.mxu0 0.0
    %573 = vmatpush2.msra.mxu0 0.0
    %574 = vmatprep.subr.mxu0 0.0
    %575 = vmatpush2.msra.mxu0 0.0
    %576 = vmatprep.mubr.f32.mxu0 0.0
    %577 = vmatmul.mubr.f32.gmra.mxu0 %v440
    %v578 = vpop.f32.mrf.mxu0
    %v579 = vadd.f32 0.0, %v578
    %v580 = vpop.f32.mrf.mxu0
    %581 = vdwg.mxu0
    %v584 = vrot.slane %v508, 7
    %v585 = vrot.slane %v510, 7
    %v588 = vadd.f32 %v84, %v584
    %v589 = vadd.f32 %v85, %v585
    %v590 = vmul.f32 %v588, %v281
    %v591 = vmul.f32 %v589, %v285
    %v592 = vtanh.pop %v590
    %v593 = vtanh.pop %v591
    %v594 = vmul.f32 %v592, %v281
    %v595 = vmul.f32 %v593, %v285
    %v596 = vadd.f32 %v594, %v298
    %v597 = vadd.f32 %v595, %v302
    %v599 = vrot.slane %v313, 7
    %v601 = vmul.f32 %v596, %v599
    %v602 = vmul.f32 %v596, %v597
    %604 = vrot.lane.b32.xlu0 %v602, 64
    %v605 = vpop.permute.xlu0 %604
    %v607 = vadd.f32 %v601, %v605
    %v608 = vtanh.pop %v607
    %v609 = vmul.f32 %v597, %v608
    %v610 = vadd.f32 %v579, %v319
    %v612 = vrot.slane %v609, 1
    %614 = vmatprep.subr.mxu0 0.0
    %615 = vmatpush1.msra.mxu0 %v337
    %616 = vmatprep.subr.mxu0 0.0
    %617 = vmatpush1.msra.mxu0 %v336
    %618 = vmatprep.subr.mxu0 0.0
    %619 = vmatpush1.msra.mxu0 %v335
    %620 = vmatprep.subr.mxu0 0.0
    %621 = vmatpush1.msra.mxu0 %v334
    %622 = vmatprep.subr.mxu0 0.0
    %623 = vmatpush1.msra.mxu0 %v333
    %624 = vmatprep.subr.mxu0 0.0
    %625 = vmatpush1.msra.mxu0 %v332
    %626 = vmatprep.subr.mxu0 0.0
    %627 = vmatpush1.msra.mxu0 %v331
    %628 = vmatprep.subr.mxu0 0.0
    %629 = vmatpush1.msra.mxu0 %v330
    %630 = vmatprep.subr.mxu0 0.0
    %631 = vmatpush1.msra.mxu0 %v329
    %632 = vmatprep.subr.mxu0 0.0
    %633 = vmatpush1.msra.mxu0 %v328
    %634 = vmatprep.subr.mxu0 0.0
    %635 = vmatpush1.msra.mxu0 %v327
    %636 = vmatprep.subr.mxu0 0.0
    %637 = vmatpush1.msra.mxu0 %v326
    %638 = vmatprep.subr.mxu0 0.0
    %639 = vmatpush1.msra.mxu0 %v325
    %640 = vmatprep.subr.mxu0 0.0
    %641 = vmatpush1.msra.mxu0 %v324
    %642 = vmatprep.subr.mxu0 0.0
    %643 = vmatpush1.msra.mxu0 %v323
    %644 = vmatprep.subr.mxu0 0.0
    %645 = vmatpush1.msra.mxu0 %v322
    %646 = vmatprep.subr.mxu0 0.0
    %647 = vmatpush2.msra.mxu0 0.0
    %648 = vmatprep.subr.mxu0 0.0
    %649 = vmatpush2.msra.mxu0 0.0
    %650 = vmatprep.subr.mxu0 0.0
    %651 = vmatpush2.msra.mxu0 0.0
    %652 = vmatprep.subr.mxu0 0.0
    %653 = vmatpush2.msra.mxu0 0.0
    %654 = vmatprep.subr.mxu0 0.0
    %655 = vmatpush2.msra.mxu0 0.0
    %656 = vmatprep.subr.mxu0 0.0
    %657 = vmatpush2.msra.mxu0 0.0
    %658 = vmatprep.subr.mxu0 0.0
    %659 = vmatpush2.msra.mxu0 0.0
    %660 = vmatprep.subr.mxu0 0.0
    %661 = vmatpush2.msra.mxu0 0.0
    %662 = vmatprep.subr.mxu0 0.0
    %663 = vmatpush2.msra.mxu0 0.0
    %664 = vmatprep.subr.mxu0 0.0
    %665 = vmatpush2.msra.mxu0 0.0
    %666 = vmatprep.subr.mxu0 0.0
    %667 = vmatpush2.msra.mxu0 0.0
    %668 = vmatprep.subr.mxu0 0.0
    %669 = vmatpush2.msra.mxu0 0.0
    %670 = vmatprep.subr.mxu0 0.0
    %671 = vmatpush2.msra.mxu0 0.0
    %672 = vmatprep.subr.mxu0 0.0
    %673 = vmatpush2.msra.mxu0 0.0
    %674 = vmatprep.subr.mxu0 0.0
    %675 = vmatpush2.msra.mxu0 0.0
    %676 = vmatprep.subr.mxu0 0.0
    %677 = vmatpush2.msra.mxu0 0.0
    %678 = vmatprep.mubr.f32.mxu0 0.0
    %679 = vmatmul.mubr.f32.gmra.mxu0 %v612
    %v680 = vpop.f32.mrf.mxu0
    %v681 = vadd.f32 0.0, %v680
    %v682 = vpop.f32.mrf.mxu0
    %683 = vdwg.mxu0
    %v684 = vadd.f32 %v610, %v681
    %v685 = vmul.f32 %v684, %v412
    %v686 = vtanh.pop %v685
    %v687 = vmul.f32 %v686, %v412
    %v688 = vadd.f32 %v687, %v420
    %690 = vrot.lane.b32.xlu0 %v688, 64
    %v691 = vpop.permute.xlu0 %690
    %v693 = vmul.f32 %v688, %v433
    %v694 = vmul.f32 %v688, %v691
    %696 = vrot.lane.b32.xlu0 %v694, 96
    %v697 = vpop.permute.xlu0 %696
    %v699 = vadd.f32 %v693, %v697
    %v700 = vtanh.pop %v699
    %v701 = vmul.f32 %v691, %v700
    %703 = vrot.lane.b32.xlu0 %v701, 64
    %v704 = vpop.permute.xlu0 %703
    %v707 = vrot.slane %v704, 7
    %v709 = vsel %vm53, %v609, %v707
    %v711 = vrot.slane %v709, 1
    %713 = vmatprep.subr.mxu0 %v132
    %714 = vmatpush1.msra.mxu0 %v131
    %715 = vmatprep.subr.mxu0 %v129
    %716 = vmatpush1.msra.mxu0 %v128
    %717 = vmatprep.subr.mxu0 %v126
    %718 = vmatpush1.msra.mxu0 %v125
    %719 = vmatprep.subr.mxu0 %v123
    %720 = vmatpush1.msra.mxu0 %v122
    %721 = vmatprep.subr.mxu0 %v120
    %722 = vmatpush1.msra.mxu0 %v119
    %723 = vmatprep.subr.mxu0 %v117
    %724 = vmatpush1.msra.mxu0 %v116
    %725 = vmatprep.subr.mxu0 %v114
    %726 = vmatpush1.msra.mxu0 %v113
    %727 = vmatprep.subr.mxu0 %v111
    %728 = vmatpush1.msra.mxu0 %v110
    %729 = vmatprep.subr.mxu0 %v108
    %730 = vmatpush1.msra.mxu0 %v107
    %731 = vmatprep.subr.mxu0 %v105
    %732 = vmatpush1.msra.mxu0 %v104
    %733 = vmatprep.subr.mxu0 %v102
    %734 = vmatpush1.msra.mxu0 %v101
    %735 = vmatprep.subr.mxu0 %v99
    %736 = vmatpush1.msra.mxu0 %v98
    %737 = vmatprep.subr.mxu0 %v96
    %738 = vmatpush1.msra.mxu0 %v95
    %739 = vmatprep.subr.mxu0 %v93
    %740 = vmatpush1.msra.mxu0 %v92
    %741 = vmatprep.subr.mxu0 %v90
    %742 = vmatpush1.msra.mxu0 %v89
    %743 = vmatprep.subr.mxu0 %v87
    %744 = vmatpush1.msra.mxu0 %v86
    %745 = vmatprep.subr.mxu0 0.0
    %746 = vmatpush2.msra.mxu0 0.0
    %747 = vmatprep.subr.mxu0 0.0
    %748 = vmatpush2.msra.mxu0 0.0
    %749 = vmatprep.subr.mxu0 0.0
    %750 = vmatpush2.msra.mxu0 0.0
    %751 = vmatprep.subr.mxu0 0.0
    %752 = vmatpush2.msra.mxu0 0.0
    %753 = vmatprep.subr.mxu0 0.0
    %754 = vmatpush2.msra.mxu0 0.0
    %755 = vmatprep.subr.mxu0 0.0
    %756 = vmatpush2.msra.mxu0 0.0
    %757 = vmatprep.subr.mxu0 0.0
    %758 = vmatpush2.msra.mxu0 0.0
    %759 = vmatprep.subr.mxu0 0.0
    %760 = vmatpush2.msra.mxu0 0.0
    %761 = vmatprep.subr.mxu0 0.0
    %762 = vmatpush2.msra.mxu0 0.0
    %763 = vmatprep.subr.mxu0 0.0
    %764 = vmatpush2.msra.mxu0 0.0
    %765 = vmatprep.subr.mxu0 0.0
    %766 = vmatpush2.msra.mxu0 0.0
    %767 = vmatprep.subr.mxu0 0.0
    %768 = vmatpush2.msra.mxu0 0.0
    %769 = vmatprep.subr.mxu0 0.0
    %770 = vmatpush2.msra.mxu0 0.0
    %771 = vmatprep.subr.mxu0 0.0
    %772 = vmatpush2.msra.mxu0 0.0
    %773 = vmatprep.subr.mxu0 0.0
    %774 = vmatpush2.msra.mxu0 0.0
    %775 = vmatprep.subr.mxu0 0.0
    %776 = vmatpush2.msra.mxu0 0.0
    %777 = vmatprep.mubr.f32.mxu0 0.0
    %778 = vmatmul.mubr.f32.gmra.mxu0 %v711
    %v779 = vpop.f32.mrf.mxu0
    %v780 = vadd.f32 0.0, %v779
    %v781 = vpop.f32.mrf.mxu0
    %v782 = vadd.f32 0.0, %v781
    %783 = vdwg.mxu0
    %784 = vmatprep.subr.mxu0 0.0
    %785 = vmatpush1.msra.mxu0 %v133
    %786 = vmatprep.subr.mxu0 0.0
    %787 = vmatpush1.msra.mxu0 %v130
    %788 = vmatprep.subr.mxu0 0.0
    %789 = vmatpush1.msra.mxu0 %v127
    %790 = vmatprep.subr.mxu0 0.0
    %791 = vmatpush1.msra.mxu0 %v124
    %792 = vmatprep.subr.mxu0 0.0
    %793 = vmatpush1.msra.mxu0 %v121
    %794 = vmatprep.subr.mxu0 0.0
    %795 = vmatpush1.msra.mxu0 %v118
    %796 = vmatprep.subr.mxu0 0.0
    %797 = vmatpush1.msra.mxu0 %v115
    %798 = vmatprep.subr.mxu0 0.0
    %799 = vmatpush1.msra.mxu0 %v112
    %800 = vmatprep.subr.mxu0 0.0
    %801 = vmatpush1.msra.mxu0 %v109
    %802 = vmatprep.subr.mxu0 0.0
    %803 = vmatpush1.msra.mxu0 %v106
    %804 = vmatprep.subr.mxu0 0.0
    %805 = vmatpush1.msra.mxu0 %v103
    %806 = vmatprep.subr.mxu0 0.0
    %807 = vmatpush1.msra.mxu0 %v100
    %808 = vmatprep.subr.mxu0 0.0
    %809 = vmatpush1.msra.mxu0 %v97
    %810 = vmatprep.subr.mxu0 0.0
    %811 = vmatpush1.msra.mxu0 %v94
    %812 = vmatprep.subr.mxu0 0.0
    %813 = vmatpush1.msra.mxu0 %v91
    %814 = vmatprep.subr.mxu0 0.0
    %815 = vmatpush1.msra.mxu0 %v88
    %816 = vmatprep.subr.mxu0 0.0
    %817 = vmatpush2.msra.mxu0 0.0
    %818 = vmatprep.subr.mxu0 0.0
    %819 = vmatpush2.msra.mxu0 0.0
    %820 = vmatprep.subr.mxu0 0.0
    %821 = vmatpush2.msra.mxu0 0.0
    %822 = vmatprep.subr.mxu0 0.0
    %823 = vmatpush2.msra.mxu0 0.0
    %824 = vmatprep.subr.mxu0 0.0
    %825 = vmatpush2.msra.mxu0 0.0
    %826 = vmatprep.subr.mxu0 0.0
    %827 = vmatpush2.msra.mxu0 0.0
    %828 = vmatprep.subr.mxu0 0.0
    %829 = vmatpush2.msra.mxu0 0.0
    %830 = vmatprep.subr.mxu0 0.0
    %831 = vmatpush2.msra.mxu0 0.0
    %832 = vmatprep.subr.mxu0 0.0
    %833 = vmatpush2.msra.mxu0 0.0
    %834 = vmatprep.subr.mxu0 0.0
    %835 = vmatpush2.msra.mxu0 0.0
    %836 = vmatprep.subr.mxu0 0.0
    %837 = vmatpush2.msra.mxu0 0.0
    %838 = vmatprep.subr.mxu0 0.0
    %839 = vmatpush2.msra.mxu0 0.0
    %840 = vmatprep.subr.mxu0 0.0
    %841 = vmatpush2.msra.mxu0 0.0
    %842 = vmatprep.subr.mxu0 0.0
    %843 = vmatpush2.msra.mxu0 0.0
    %844 = vmatprep.subr.mxu0 0.0
    %845 = vmatpush2.msra.mxu0 0.0
    %846 = vmatprep.subr.mxu0 0.0
    %847 = vmatpush2.msra.mxu0 0.0
    %848 = vmatprep.mubr.f32.mxu0 0.0
    %849 = vmatmul.mubr.f32.gmra.mxu0 %v711
    %v850 = vpop.f32.mrf.mxu0
    %v851 = vadd.f32 0.0, %v850
    %v852 = vpop.f32.mrf.mxu0
    %853 = vdwg.mxu0
    %v856 = vrot.slane %v780, 6
    %v857 = vrot.slane %v782, 6
    %v860 = vadd.f32 %v84, %v856
    %v861 = vadd.f32 %v85, %v857
    %v862 = vmul.f32 %v860, %v281
    %v863 = vmul.f32 %v861, %v285
    %v864 = vtanh.pop %v862
    %v865 = vtanh.pop %v863
    %v866 = vmul.f32 %v864, %v281
    %v867 = vmul.f32 %v865, %v285
    %v868 = vadd.f32 %v866, %v298
    %v869 = vadd.f32 %v867, %v302
    %v871 = vrot.slane %v607, 7
    %v873 = vmul.f32 %v868, %v871
    %v874 = vmul.f32 %v868, %v869
    %876 = vrot.lane.b32.xlu0 %v874, 64
    %v877 = vpop.permute.xlu0 %876
    %v879 = vadd.f32 %v873, %v877
    %v880 = vtanh.pop %v879
    %v881 = vmul.f32 %v869, %v880
    %v882 = vadd.f32 %v851, %v319
    %v884 = vrot.slane %v881, 2
    %886 = vmatprep.subr.mxu0 0.0
    %887 = vmatpush1.msra.mxu0 %v337
    %888 = vmatprep.subr.mxu0 0.0
    %889 = vmatpush1.msra.mxu0 %v336
    %890 = vmatprep.subr.mxu0 0.0
    %891 = vmatpush1.msra.mxu0 %v335
    %892 = vmatprep.subr.mxu0 0.0
    %893 = vmatpush1.msra.mxu0 %v334
    %894 = vmatprep.subr.mxu0 0.0
    %895 = vmatpush1.msra.mxu0 %v333
    %896 = vmatprep.subr.mxu0 0.0
    %897 = vmatpush1.msra.mxu0 %v332
    %898 = vmatprep.subr.mxu0 0.0
    %899 = vmatpush1.msra.mxu0 %v331
    %900 = vmatprep.subr.mxu0 0.0
    %901 = vmatpush1.msra.mxu0 %v330
    %902 = vmatprep.subr.mxu0 0.0
    %903 = vmatpush1.msra.mxu0 %v329
    %904 = vmatprep.subr.mxu0 0.0
    %905 = vmatpush1.msra.mxu0 %v328
    %906 = vmatprep.subr.mxu0 0.0
    %907 = vmatpush1.msra.mxu0 %v327
    %908 = vmatprep.subr.mxu0 0.0
    %909 = vmatpush1.msra.mxu0 %v326
    %910 = vmatprep.subr.mxu0 0.0
    %911 = vmatpush1.msra.mxu0 %v325
    %912 = vmatprep.subr.mxu0 0.0
    %913 = vmatpush1.msra.mxu0 %v324
    %914 = vmatprep.subr.mxu0 0.0
    %915 = vmatpush1.msra.mxu0 %v323
    %916 = vmatprep.subr.mxu0 0.0
    %917 = vmatpush1.msra.mxu0 %v322
    %918 = vmatprep.subr.mxu0 0.0
    %919 = vmatpush2.msra.mxu0 0.0
    %920 = vmatprep.subr.mxu0 0.0
    %921 = vmatpush2.msra.mxu0 0.0
    %922 = vmatprep.subr.mxu0 0.0
    %923 = vmatpush2.msra.mxu0 0.0
    %924 = vmatprep.subr.mxu0 0.0
    %925 = vmatpush2.msra.mxu0 0.0
    %926 = vmatprep.subr.mxu0 0.0
    %927 = vmatpush2.msra.mxu0 0.0
    %928 = vmatprep.subr.mxu0 0.0
    %929 = vmatpush2.msra.mxu0 0.0
    %930 = vmatprep.subr.mxu0 0.0
    %931 = vmatpush2.msra.mxu0 0.0
    %932 = vmatprep.subr.mxu0 0.0
    %933 = vmatpush2.msra.mxu0 0.0
    %934 = vmatprep.subr.mxu0 0.0
    %935 = vmatpush2.msra.mxu0 0.0
    %936 = vmatprep.subr.mxu0 0.0
    %937 = vmatpush2.msra.mxu0 0.0
    %938 = vmatprep.subr.mxu0 0.0
    %939 = vmatpush2.msra.mxu0 0.0
    %940 = vmatprep.subr.mxu0 0.0
    %941 = vmatpush2.msra.mxu0 0.0
    %942 = vmatprep.subr.mxu0 0.0
    %943 = vmatpush2.msra.mxu0 0.0
    %944 = vmatprep.subr.mxu0 0.0
    %945 = vmatpush2.msra.mxu0 0.0
    %946 = vmatprep.subr.mxu0 0.0
    %947 = vmatpush2.msra.mxu0 0.0
    %948 = vmatprep.subr.mxu0 0.0
    %949 = vmatpush2.msra.mxu0 0.0
    %950 = vmatprep.mubr.f32.mxu0 0.0
    %951 = vmatmul.mubr.f32.gmra.mxu0 %v884
    %v952 = vpop.f32.mrf.mxu0
    %v953 = vadd.f32 0.0, %v952
    %v954 = vpop.f32.mrf.mxu0
    %955 = vdwg.mxu0
    %v956 = vadd.f32 %v882, %v953
    %v957 = vmul.f32 %v956, %v412
    %v958 = vtanh.pop %v957
    %v959 = vmul.f32 %v958, %v412
    %v960 = vadd.f32 %v959, %v420
    %962 = vrot.lane.b32.xlu0 %v960, 64
    %v963 = vpop.permute.xlu0 %962
    %v965 = vmul.f32 %v960, %v699
    %v966 = vmul.f32 %v960, %v963
    %968 = vrot.lane.b32.xlu0 %v966, 96
    %v969 = vpop.permute.xlu0 %968
    %v971 = vadd.f32 %v965, %v969
    %v972 = vtanh.pop %v971
    %v973 = vmul.f32 %v963, %v972
    %975 = vrot.lane.b32.xlu0 %v973, 64
    %v976 = vpop.permute.xlu0 %975
    %v979 = vrot.slane %v976, 6
    %v981 = vsel %vm53, %v881, %v979
    %v983 = vrot.slane %v981, 2
    %985 = vmatprep.subr.mxu0 %v132
    %986 = vmatpush1.msra.mxu0 %v131
    %987 = vmatprep.subr.mxu0 %v129
    %988 = vmatpush1.msra.mxu0 %v128
    %989 = vmatprep.subr.mxu0 %v126
    %990 = vmatpush1.msra.mxu0 %v125
    %991 = vmatprep.subr.mxu0 %v123
    %992 = vmatpush1.msra.mxu0 %v122
    %993 = vmatprep.subr.mxu0 %v120
    %994 = vmatpush1.msra.mxu0 %v119
    %995 = vmatprep.subr.mxu0 %v117
    %996 = vmatpush1.msra.mxu0 %v116
    %997 = vmatprep.subr.mxu0 %v114
    %998 = vmatpush1.msra.mxu0 %v113
    %999 = vmatprep.subr.mxu0 %v111
    %1000 = vmatpush1.msra.mxu0 %v110
    %1001 = vmatprep.subr.mxu0 %v108
    %1002 = vmatpush1.msra.mxu0 %v107
    %1003 = vmatprep.subr.mxu0 %v105
    %1004 = vmatpush1.msra.mxu0 %v104
    %1005 = vmatprep.subr.mxu0 %v102
    %1006 = vmatpush1.msra.mxu0 %v101
    %1007 = vmatprep.subr.mxu0 %v99
    %1008 = vmatpush1.msra.mxu0 %v98
    %1009 = vmatprep.subr.mxu0 %v96
    %1010 = vmatpush1.msra.mxu0 %v95
    %1011 = vmatprep.subr.mxu0 %v93
    %1012 = vmatpush1.msra.mxu0 %v92
    %1013 = vmatprep.subr.mxu0 %v90
    %1014 = vmatpush1.msra.mxu0 %v89
    %1015 = vmatprep.subr.mxu0 %v87
    %1016 = vmatpush1.msra.mxu0 %v86
    %1017 = vmatprep.subr.mxu0 0.0
    %1018 = vmatpush2.msra.mxu0 0.0
    %1019 = vmatprep.subr.mxu0 0.0
    %1020 = vmatpush2.msra.mxu0 0.0
    %1021 = vmatprep.subr.mxu0 0.0
    %1022 = vmatpush2.msra.mxu0 0.0
    %1023 = vmatprep.subr.mxu0 0.0
    %1024 = vmatpush2.msra.mxu0 0.0
    %1025 = vmatprep.subr.mxu0 0.0
    %1026 = vmatpush2.msra.mxu0 0.0
    %1027 = vmatprep.subr.mxu0 0.0
    %1028 = vmatpush2.msra.mxu0 0.0
    %1029 = vmatprep.subr.mxu0 0.0
    %1030 = vmatpush2.msra.mxu0 0.0
    %1031 = vmatprep.subr.mxu0 0.0
    %1032 = vmatpush2.msra.mxu0 0.0
    %1033 = vmatprep.subr.mxu0 0.0
    %1034 = vmatpush2.msra.mxu0 0.0
    %1035 = vmatprep.subr.mxu0 0.0
    %1036 = vmatpush2.msra.mxu0 0.0
    %1037 = vmatprep.subr.mxu0 0.0
    %1038 = vmatpush2.msra.mxu0 0.0
    %1039 = vmatprep.subr.mxu0 0.0
    %1040 = vmatpush2.msra.mxu0 0.0
    %1041 = vmatprep.subr.mxu0 0.0
    %1042 = vmatpush2.msra.mxu0 0.0
    %1043 = vmatprep.subr.mxu0 0.0
    %1044 = vmatpush2.msra.mxu0 0.0
    %1045 = vmatprep.subr.mxu0 0.0
    %1046 = vmatpush2.msra.mxu0 0.0
    %1047 = vmatprep.subr.mxu0 0.0
    %1048 = vmatpush2.msra.mxu0 0.0
    %1049 = vmatprep.mubr.f32.mxu0 0.0
    %1050 = vmatmul.mubr.f32.gmra.mxu0 %v983
    %v1051 = vpop.f32.mrf.mxu0
    %v1052 = vadd.f32 0.0, %v1051
    %v1053 = vpop.f32.mrf.mxu0
    %v1054 = vadd.f32 0.0, %v1053
    %1055 = vdwg.mxu0
    %1056 = vmatprep.subr.mxu0 0.0
    %1057 = vmatpush1.msra.mxu0 %v133
    %1058 = vmatprep.subr.mxu0 0.0
    %1059 = vmatpush1.msra.mxu0 %v130
    %1060 = vmatprep.subr.mxu0 0.0
    %1061 = vmatpush1.msra.mxu0 %v127
    %1062 = vmatprep.subr.mxu0 0.0
    %1063 = vmatpush1.msra.mxu0 %v124
    %1064 = vmatprep.subr.mxu0 0.0
    %1065 = vmatpush1.msra.mxu0 %v121
    %1066 = vmatprep.subr.mxu0 0.0
    %1067 = vmatpush1.msra.mxu0 %v118
    %1068 = vmatprep.subr.mxu0 0.0
    %1069 = vmatpush1.msra.mxu0 %v115
    %1070 = vmatprep.subr.mxu0 0.0
    %1071 = vmatpush1.msra.mxu0 %v112
    %1072 = vmatprep.subr.mxu0 0.0
    %1073 = vmatpush1.msra.mxu0 %v109
    %1074 = vmatprep.subr.mxu0 0.0
    %1075 = vmatpush1.msra.mxu0 %v106
    %1076 = vmatprep.subr.mxu0 0.0
    %1077 = vmatpush1.msra.mxu0 %v103
    %1078 = vmatprep.subr.mxu0 0.0
    %1079 = vmatpush1.msra.mxu0 %v100
    %1080 = vmatprep.subr.mxu0 0.0
    %1081 = vmatpush1.msra.mxu0 %v97
    %1082 = vmatprep.subr.mxu0 0.0
    %1083 = vmatpush1.msra.mxu0 %v94
    %1084 = vmatprep.subr.mxu0 0.0
    %1085 = vmatpush1.msra.mxu0 %v91
    %1086 = vmatprep.subr.mxu0 0.0
    %1087 = vmatpush1.msra.mxu0 %v88
    %1088 = vmatprep.subr.mxu0 0.0
    %1089 = vmatpush2.msra.mxu0 0.0
    %1090 = vmatprep.subr.mxu0 0.0
    %1091 = vmatpush2.msra.mxu0 0.0
    %1092 = vmatprep.subr.mxu0 0.0
    %1093 = vmatpush2.msra.mxu0 0.0
    %1094 = vmatprep.subr.mxu0 0.0
    %1095 = vmatpush2.msra.mxu0 0.0
    %1096 = vmatprep.subr.mxu0 0.0
    %1097 = vmatpush2.msra.mxu0 0.0
    %1098 = vmatprep.subr.mxu0 0.0
    %1099 = vmatpush2.msra.mxu0 0.0
    %1100 = vmatprep.subr.mxu0 0.0
    %1101 = vmatpush2.msra.mxu0 0.0
    %1102 = vmatprep.subr.mxu0 0.0
    %1103 = vmatpush2.msra.mxu0 0.0
    %1104 = vmatprep.subr.mxu0 0.0
    %1105 = vmatpush2.msra.mxu0 0.0
    %1106 = vmatprep.subr.mxu0 0.0
    %1107 = vmatpush2.msra.mxu0 0.0
    %1108 = vmatprep.subr.mxu0 0.0
    %1109 = vmatpush2.msra.mxu0 0.0
    %1110 = vmatprep.subr.mxu0 0.0
    %1111 = vmatpush2.msra.mxu0 0.0
    %1112 = vmatprep.subr.mxu0 0.0
    %1113 = vmatpush2.msra.mxu0 0.0
    %1114 = vmatprep.subr.mxu0 0.0
    %1115 = vmatpush2.msra.mxu0 0.0
    %1116 = vmatprep.subr.mxu0 0.0
    %1117 = vmatpush2.msra.mxu0 0.0
    %1118 = vmatprep.subr.mxu0 0.0
    %1119 = vmatpush2.msra.mxu0 0.0
    %1120 = vmatprep.mubr.f32.mxu0 0.0
    %1121 = vmatmul.mubr.f32.gmra.mxu0 %v983
    %v1122 = vpop.f32.mrf.mxu0
    %v1123 = vadd.f32 0.0, %v1122
    %v1124 = vpop.f32.mrf.mxu0
    %1125 = vdwg.mxu0
    %v1128 = vrot.slane %v1052, 5
    %v1129 = vrot.slane %v1054, 5
    %v1132 = vadd.f32 %v84, %v1128
    %v1133 = vadd.f32 %v85, %v1129
    %v1134 = vmul.f32 %v1132, %v281
    %v1135 = vmul.f32 %v1133, %v285
    %v1136 = vtanh.pop %v1134
    %v1137 = vtanh.pop %v1135
    %v1138 = vmul.f32 %v1136, %v281
    %v1139 = vmul.f32 %v1137, %v285
    %v1140 = vadd.f32 %v1138, %v298
    %v1141 = vadd.f32 %v1139, %v302
    %v1143 = vrot.slane %v879, 7
    %v1145 = vmul.f32 %v1140, %v1143
    %v1146 = vmul.f32 %v1140, %v1141
    %1148 = vrot.lane.b32.xlu0 %v1146, 64
    %v1149 = vpop.permute.xlu0 %1148
    %v1151 = vadd.f32 %v1145, %v1149
    %v1152 = vtanh.pop %v1151
    %v1153 = vmul.f32 %v1141, %v1152
    %v1154 = vadd.f32 %v1123, %v319
    %v1156 = vrot.slane %v1153, 3
    %1158 = vmatprep.subr.mxu0 0.0
    %1159 = vmatpush1.msra.mxu0 %v337
    %1160 = vmatprep.subr.mxu0 0.0
    %1161 = vmatpush1.msra.mxu0 %v336
    %1162 = vmatprep.subr.mxu0 0.0
    %1163 = vmatpush1.msra.mxu0 %v335
    %1164 = vmatprep.subr.mxu0 0.0
    %1165 = vmatpush1.msra.mxu0 %v334
    %1166 = vmatprep.subr.mxu0 0.0
    %1167 = vmatpush1.msra.mxu0 %v333
    %1168 = vmatprep.subr.mxu0 0.0
    %1169 = vmatpush1.msra.mxu0 %v332
    %1170 = vmatprep.subr.mxu0 0.0
    %1171 = vmatpush1.msra.mxu0 %v331
    %1172 = vmatprep.subr.mxu0 0.0
    %1173 = vmatpush1.msra.mxu0 %v330
    %1174 = vmatprep.subr.mxu0 0.0
    %1175 = vmatpush1.msra.mxu0 %v329
    %1176 = vmatprep.subr.mxu0 0.0
    %1177 = vmatpush1.msra.mxu0 %v328
    %1178 = vmatprep.subr.mxu0 0.0
    %1179 = vmatpush1.msra.mxu0 %v327
    %1180 = vmatprep.subr.mxu0 0.0
    %1181 = vmatpush1.msra.mxu0 %v326
    %1182 = vmatprep.subr.mxu0 0.0
    %1183 = vmatpush1.msra.mxu0 %v325
    %1184 = vmatprep.subr.mxu0 0.0
    %1185 = vmatpush1.msra.mxu0 %v324
    %1186 = vmatprep.subr.mxu0 0.0
    %1187 = vmatpush1.msra.mxu0 %v323
    %1188 = vmatprep.subr.mxu0 0.0
    %1189 = vmatpush1.msra.mxu0 %v322
    %1190 = vmatprep.subr.mxu0 0.0
    %1191 = vmatpush2.msra.mxu0 0.0
    %1192 = vmatprep.subr.mxu0 0.0
    %1193 = vmatpush2.msra.mxu0 0.0
    %1194 = vmatprep.subr.mxu0 0.0
    %1195 = vmatpush2.msra.mxu0 0.0
    %1196 = vmatprep.subr.mxu0 0.0
    %1197 = vmatpush2.msra.mxu0 0.0
    %1198 = vmatprep.subr.mxu0 0.0
    %1199 = vmatpush2.msra.mxu0 0.0
    %1200 = vmatprep.subr.mxu0 0.0
    %1201 = vmatpush2.msra.mxu0 0.0
    %1202 = vmatprep.subr.mxu0 0.0
    %1203 = vmatpush2.msra.mxu0 0.0
    %1204 = vmatprep.subr.mxu0 0.0
    %1205 = vmatpush2.msra.mxu0 0.0
    %1206 = vmatprep.subr.mxu0 0.0
    %1207 = vmatpush2.msra.mxu0 0.0
    %1208 = vmatprep.subr.mxu0 0.0
    %1209 = vmatpush2.msra.mxu0 0.0
    %1210 = vmatprep.subr.mxu0 0.0
    %1211 = vmatpush2.msra.mxu0 0.0
    %1212 = vmatprep.subr.mxu0 0.0
    %1213 = vmatpush2.msra.mxu0 0.0
    %1214 = vmatprep.subr.mxu0 0.0
    %1215 = vmatpush2.msra.mxu0 0.0
    %1216 = vmatprep.subr.mxu0 0.0
    %1217 = vmatpush2.msra.mxu0 0.0
    %1218 = vmatprep.subr.mxu0 0.0
    %1219 = vmatpush2.msra.mxu0 0.0
    %1220 = vmatprep.subr.mxu0 0.0
    %1221 = vmatpush2.msra.mxu0 0.0
    %1222 = vmatprep.mubr.f32.mxu0 0.0
    %1223 = vmatmul.mubr.f32.gmra.mxu0 %v1156
    %v1224 = vpop.f32.mrf.mxu0
    %v1225 = vadd.f32 0.0, %v1224
    %v1226 = vpop.f32.mrf.mxu0
    %1227 = vdwg.mxu0
    %v1228 = vadd.f32 %v1154, %v1225
    %v1229 = vmul.f32 %v1228, %v412
    %v1230 = vtanh.pop %v1229
    %v1231 = vmul.f32 %v1230, %v412
    %v1232 = vadd.f32 %v1231, %v420
    %1234 = vrot.lane.b32.xlu0 %v1232, 64
    %v1235 = vpop.permute.xlu0 %1234
    %v1237 = vmul.f32 %v1232, %v971
    %v1238 = vmul.f32 %v1232, %v1235
    %1240 = vrot.lane.b32.xlu0 %v1238, 96
    %v1241 = vpop.permute.xlu0 %1240
    %v1243 = vadd.f32 %v1237, %v1241
    %v1244 = vtanh.pop %v1243
    %v1245 = vmul.f32 %v1235, %v1244
    %1247 = vrot.lane.b32.xlu0 %v1245, 64
    %v1248 = vpop.permute.xlu0 %1247
    %v1251 = vrot.slane %v1248, 5
    %v1253 = vsel %vm53, %v1153, %v1251
    %v1255 = vrot.slane %v1253, 3
    %1257 = vmatprep.subr.mxu0 %v132
    %1258 = vmatpush1.msra.mxu0 %v131
    %1259 = vmatprep.subr.mxu0 %v129
    %1260 = vmatpush1.msra.mxu0 %v128
    %1261 = vmatprep.subr.mxu0 %v126
    %1262 = vmatpush1.msra.mxu0 %v125
    %1263 = vmatprep.subr.mxu0 %v123
    %1264 = vmatpush1.msra.mxu0 %v122
    %1265 = vmatprep.subr.mxu0 %v120
    %1266 = vmatpush1.msra.mxu0 %v119
    %1267 = vmatprep.subr.mxu0 %v117
    %1268 = vmatpush1.msra.mxu0 %v116
    %1269 = vmatprep.subr.mxu0 %v114
    %1270 = vmatpush1.msra.mxu0 %v113
    %1271 = vmatprep.subr.mxu0 %v111
    %1272 = vmatpush1.msra.mxu0 %v110
    %1273 = vmatprep.subr.mxu0 %v108
    %1274 = vmatpush1.msra.mxu0 %v107
    %1275 = vmatprep.subr.mxu0 %v105
    %1276 = vmatpush1.msra.mxu0 %v104
    %1277 = vmatprep.subr.mxu0 %v102
    %1278 = vmatpush1.msra.mxu0 %v101
    %1279 = vmatprep.subr.mxu0 %v99
    %1280 = vmatpush1.msra.mxu0 %v98
    %1281 = vmatprep.subr.mxu0 %v96
    %1282 = vmatpush1.msra.mxu0 %v95
    %1283 = vmatprep.subr.mxu0 %v93
    %1284 = vmatpush1.msra.mxu0 %v92
    %1285 = vmatprep.subr.mxu0 %v90
    %1286 = vmatpush1.msra.mxu0 %v89
    %1287 = vmatprep.subr.mxu0 %v87
    %1288 = vmatpush1.msra.mxu0 %v86
    %1289 = vmatprep.subr.mxu0 0.0
    %1290 = vmatpush2.msra.mxu0 0.0
    %1291 = vmatprep.subr.mxu0 0.0
    %1292 = vmatpush2.msra.mxu0 0.0
    %1293 = vmatprep.subr.mxu0 0.0
    %1294 = vmatpush2.msra.mxu0 0.0
    %1295 = vmatprep.subr.mxu0 0.0
    %1296 = vmatpush2.msra.mxu0 0.0
    %1297 = vmatprep.subr.mxu0 0.0
    %1298 = vmatpush2.msra.mxu0 0.0
    %1299 = vmatprep.subr.mxu0 0.0
    %1300 = vmatpush2.msra.mxu0 0.0
    %1301 = vmatprep.subr.mxu0 0.0
    %1302 = vmatpush2.msra.mxu0 0.0
    %1303 = vmatprep.subr.mxu0 0.0
    %1304 = vmatpush2.msra.mxu0 0.0
    %1305 = vmatprep.subr.mxu0 0.0
    %1306 = vmatpush2.msra.mxu0 0.0
    %1307 = vmatprep.subr.mxu0 0.0
    %1308 = vmatpush2.msra.mxu0 0.0
    %1309 = vmatprep.subr.mxu0 0.0
    %1310 = vmatpush2.msra.mxu0 0.0
    %1311 = vmatprep.subr.mxu0 0.0
    %1312 = vmatpush2.msra.mxu0 0.0
    %1313 = vmatprep.subr.mxu0 0.0
    %1314 = vmatpush2.msra.mxu0 0.0
    %1315 = vmatprep.subr.mxu0 0.0
    %1316 = vmatpush2.msra.mxu0 0.0
    %1317 = vmatprep.subr.mxu0 0.0
    %1318 = vmatpush2.msra.mxu0 0.0
    %1319 = vmatprep.subr.mxu0 0.0
    %1320 = vmatpush2.msra.mxu0 0.0
    %1321 = vmatprep.mubr.f32.mxu0 0.0
    %1322 = vmatmul.mubr.f32.gmra.mxu0 %v1255
    %v1323 = vpop.f32.mrf.mxu0
    %v1324 = vadd.f32 0.0, %v1323
    %v1325 = vpop.f32.mrf.mxu0
    %v1326 = vadd.f32 0.0, %v1325
    %1327 = vdwg.mxu0
    %1328 = vmatprep.subr.mxu0 0.0
    %1329 = vmatpush1.msra.mxu0 %v133
    %1330 = vmatprep.subr.mxu0 0.0
    %1331 = vmatpush1.msra.mxu0 %v130
    %1332 = vmatprep.subr.mxu0 0.0
    %1333 = vmatpush1.msra.mxu0 %v127
    %1334 = vmatprep.subr.mxu0 0.0
    %1335 = vmatpush1.msra.mxu0 %v124
    %1336 = vmatprep.subr.mxu0 0.0
    %1337 = vmatpush1.msra.mxu0 %v121
    %1338 = vmatprep.subr.mxu0 0.0
    %1339 = vmatpush1.msra.mxu0 %v118
    %1340 = vmatprep.subr.mxu0 0.0
    %1341 = vmatpush1.msra.mxu0 %v115
    %1342 = vmatprep.subr.mxu0 0.0
    %1343 = vmatpush1.msra.mxu0 %v112
    %1344 = vmatprep.subr.mxu0 0.0
    %1345 = vmatpush1.msra.mxu0 %v109
    %1346 = vmatprep.subr.mxu0 0.0
    %1347 = vmatpush1.msra.mxu0 %v106
    %1348 = vmatprep.subr.mxu0 0.0
    %1349 = vmatpush1.msra.mxu0 %v103
    %1350 = vmatprep.subr.mxu0 0.0
    %1351 = vmatpush1.msra.mxu0 %v100
    %1352 = vmatprep.subr.mxu0 0.0
    %1353 = vmatpush1.msra.mxu0 %v97
    %1354 = vmatprep.subr.mxu0 0.0
    %1355 = vmatpush1.msra.mxu0 %v94
    %1356 = vmatprep.subr.mxu0 0.0
    %1357 = vmatpush1.msra.mxu0 %v91
    %1358 = vmatprep.subr.mxu0 0.0
    %1359 = vmatpush1.msra.mxu0 %v88
    %1360 = vmatprep.subr.mxu0 0.0
    %1361 = vmatpush2.msra.mxu0 0.0
    %1362 = vmatprep.subr.mxu0 0.0
    %1363 = vmatpush2.msra.mxu0 0.0
    %1364 = vmatprep.subr.mxu0 0.0
    %1365 = vmatpush2.msra.mxu0 0.0
    %1366 = vmatprep.subr.mxu0 0.0
    %1367 = vmatpush2.msra.mxu0 0.0
    %1368 = vmatprep.subr.mxu0 0.0
    %1369 = vmatpush2.msra.mxu0 0.0
    %1370 = vmatprep.subr.mxu0 0.0
    %1371 = vmatpush2.msra.mxu0 0.0
    %1372 = vmatprep.subr.mxu0 0.0
    %1373 = vmatpush2.msra.mxu0 0.0
    %1374 = vmatprep.subr.mxu0 0.0
    %1375 = vmatpush2.msra.mxu0 0.0
    %1376 = vmatprep.subr.mxu0 0.0
    %1377 = vmatpush2.msra.mxu0 0.0
    %1378 = vmatprep.subr.mxu0 0.0
    %1379 = vmatpush2.msra.mxu0 0.0
    %1380 = vmatprep.subr.mxu0 0.0
    %1381 = vmatpush2.msra.mxu0 0.0
    %1382 = vmatprep.subr.mxu0 0.0
    %1383 = vmatpush2.msra.mxu0 0.0
    %1384 = vmatprep.subr.mxu0 0.0
    %1385 = vmatpush2.msra.mxu0 0.0
    %1386 = vmatprep.subr.mxu0 0.0
    %1387 = vmatpush2.msra.mxu0 0.0
    %1388 = vmatprep.subr.mxu0 0.0
    %1389 = vmatpush2.msra.mxu0 0.0
    %1390 = vmatprep.subr.mxu0 0.0
    %1391 = vmatpush2.msra.mxu0 0.0
    %1392 = vmatprep.mubr.f32.mxu0 0.0
    %1393 = vmatmul.mubr.f32.gmra.mxu0 %v1255
    %v1394 = vpop.f32.mrf.mxu0
    %v1395 = vadd.f32 0.0, %v1394
    %v1396 = vpop.f32.mrf.mxu0
    %1397 = vdwg.mxu0
    %v1400 = vrot.slane %v1324, 4
    %v1401 = vrot.slane %v1326, 4
    %v1404 = vadd.f32 %v84, %v1400
    %v1405 = vadd.f32 %v85, %v1401
    %v1406 = vmul.f32 %v1404, %v281
    %v1407 = vmul.f32 %v1405, %v285
    %v1408 = vtanh.pop %v1406
    %v1409 = vtanh.pop %v1407
    %v1410 = vmul.f32 %v1408, %v281
    %v1411 = vmul.f32 %v1409, %v285
    %v1412 = vadd.f32 %v1410, %v298
    %v1413 = vadd.f32 %v1411, %v302
    %v1415 = vrot.slane %v1151, 7
    %v1417 = vmul.f32 %v1412, %v1415
    %v1418 = vmul.f32 %v1412, %v1413
    %1420 = vrot.lane.b32.xlu0 %v1418, 64
    %v1421 = vpop.permute.xlu0 %1420
    %v1423 = vadd.f32 %v1417, %v1421
    %v1424 = vtanh.pop %v1423
    %v1425 = vmul.f32 %v1413, %v1424
    %v1426 = vadd.f32 %v1395, %v319
    %v1428 = vrot.slane %v1425, 4
    %1430 = vmatprep.subr.mxu0 0.0
    %1431 = vmatpush1.msra.mxu0 %v337
    %1432 = vmatprep.subr.mxu0 0.0
    %1433 = vmatpush1.msra.mxu0 %v336
    %1434 = vmatprep.subr.mxu0 0.0
    %1435 = vmatpush1.msra.mxu0 %v335
    %1436 = vmatprep.subr.mxu0 0.0
    %1437 = vmatpush1.msra.mxu0 %v334
    %1438 = vmatprep.subr.mxu0 0.0
    %1439 = vmatpush1.msra.mxu0 %v333
    %1440 = vmatprep.subr.mxu0 0.0
    %1441 = vmatpush1.msra.mxu0 %v332
    %1442 = vmatprep.subr.mxu0 0.0
    %1443 = vmatpush1.msra.mxu0 %v331
    %1444 = vmatprep.subr.mxu0 0.0
    %1445 = vmatpush1.msra.mxu0 %v330
    %1446 = vmatprep.subr.mxu0 0.0
    %1447 = vmatpush1.msra.mxu0 %v329
    %1448 = vmatprep.subr.mxu0 0.0
    %1449 = vmatpush1.msra.mxu0 %v328
    %1450 = vmatprep.subr.mxu0 0.0
    %1451 = vmatpush1.msra.mxu0 %v327
    %1452 = vmatprep.subr.mxu0 0.0
    %1453 = vmatpush1.msra.mxu0 %v326
    %1454 = vmatprep.subr.mxu0 0.0
    %1455 = vmatpush1.msra.mxu0 %v325
    %1456 = vmatprep.subr.mxu0 0.0
    %1457 = vmatpush1.msra.mxu0 %v324
    %1458 = vmatprep.subr.mxu0 0.0
    %1459 = vmatpush1.msra.mxu0 %v323
    %1460 = vmatprep.subr.mxu0 0.0
    %1461 = vmatpush1.msra.mxu0 %v322
    %1462 = vmatprep.subr.mxu0 0.0
    %1463 = vmatpush2.msra.mxu0 0.0
    %1464 = vmatprep.subr.mxu0 0.0
    %1465 = vmatpush2.msra.mxu0 0.0
    %1466 = vmatprep.subr.mxu0 0.0
    %1467 = vmatpush2.msra.mxu0 0.0
    %1468 = vmatprep.subr.mxu0 0.0
    %1469 = vmatpush2.msra.mxu0 0.0
    %1470 = vmatprep.subr.mxu0 0.0
    %1471 = vmatpush2.msra.mxu0 0.0
    %1472 = vmatprep.subr.mxu0 0.0
    %1473 = vmatpush2.msra.mxu0 0.0
    %1474 = vmatprep.subr.mxu0 0.0
    %1475 = vmatpush2.msra.mxu0 0.0
    %1476 = vmatprep.subr.mxu0 0.0
    %1477 = vmatpush2.msra.mxu0 0.0
    %1478 = vmatprep.subr.mxu0 0.0
    %1479 = vmatpush2.msra.mxu0 0.0
    %1480 = vmatprep.subr.mxu0 0.0
    %1481 = vmatpush2.msra.mxu0 0.0
    %1482 = vmatprep.subr.mxu0 0.0
    %1483 = vmatpush2.msra.mxu0 0.0
    %1484 = vmatprep.subr.mxu0 0.0
    %1485 = vmatpush2.msra.mxu0 0.0
    %1486 = vmatprep.subr.mxu0 0.0
    %1487 = vmatpush2.msra.mxu0 0.0
    %1488 = vmatprep.subr.mxu0 0.0
    %1489 = vmatpush2.msra.mxu0 0.0
    %1490 = vmatprep.subr.mxu0 0.0
    %1491 = vmatpush2.msra.mxu0 0.0
    %1492 = vmatprep.subr.mxu0 0.0
    %1493 = vmatpush2.msra.mxu0 0.0
    %1494 = vmatprep.mubr.f32.mxu0 0.0
    %1495 = vmatmul.mubr.f32.gmra.mxu0 %v1428
    %v1496 = vpop.f32.mrf.mxu0
    %v1497 = vadd.f32 0.0, %v1496
    %v1498 = vpop.f32.mrf.mxu0
    %1499 = vdwg.mxu0
    %v1500 = vadd.f32 %v1426, %v1497
    %v1501 = vmul.f32 %v1500, %v412
    %v1502 = vtanh.pop %v1501
    %v1503 = vmul.f32 %v1502, %v412
    %v1504 = vadd.f32 %v1503, %v420
    %1506 = vrot.lane.b32.xlu0 %v1504, 64
    %v1507 = vpop.permute.xlu0 %1506
    %v1509 = vmul.f32 %v1504, %v1243
    %v1510 = vmul.f32 %v1504, %v1507
    %1512 = vrot.lane.b32.xlu0 %v1510, 96
    %v1513 = vpop.permute.xlu0 %1512
    %v1515 = vadd.f32 %v1509, %v1513
    %v1516 = vtanh.pop %v1515
    %v1517 = vmul.f32 %v1507, %v1516
    %1519 = vrot.lane.b32.xlu0 %v1517, 64
    %v1520 = vpop.permute.xlu0 %1519
    %v1523 = vrot.slane %v1520, 4
    %v1525 = vsel %vm53, %v1425, %v1523
    %v1527 = vrot.slane %v1525, 4
    %1529 = vmatprep.subr.mxu0 %v132
    %1530 = vmatpush1.msra.mxu0 %v131
    %1531 = vmatprep.subr.mxu0 %v129
    %1532 = vmatpush1.msra.mxu0 %v128
    %1533 = vmatprep.subr.mxu0 %v126
    %1534 = vmatpush1.msra.mxu0 %v125
    %1535 = vmatprep.subr.mxu0 %v123
    %1536 = vmatpush1.msra.mxu0 %v122
    %1537 = vmatprep.subr.mxu0 %v120
    %1538 = vmatpush1.msra.mxu0 %v119
    %1539 = vmatprep.subr.mxu0 %v117
    %1540 = vmatpush1.msra.mxu0 %v116
    %1541 = vmatprep.subr.mxu0 %v114
    %1542 = vmatpush1.msra.mxu0 %v113
    %1543 = vmatprep.subr.mxu0 %v111
    %1544 = vmatpush1.msra.mxu0 %v110
    %1545 = vmatprep.subr.mxu0 %v108
    %1546 = vmatpush1.msra.mxu0 %v107
    %1547 = vmatprep.subr.mxu0 %v105
    %1548 = vmatpush1.msra.mxu0 %v104
    %1549 = vmatprep.subr.mxu0 %v102
    %1550 = vmatpush1.msra.mxu0 %v101
    %1551 = vmatprep.subr.mxu0 %v99
    %1552 = vmatpush1.msra.mxu0 %v98
    %1553 = vmatprep.subr.mxu0 %v96
    %1554 = vmatpush1.msra.mxu0 %v95
    %1555 = vmatprep.subr.mxu0 %v93
    %1556 = vmatpush1.msra.mxu0 %v92
    %1557 = vmatprep.subr.mxu0 %v90
    %1558 = vmatpush1.msra.mxu0 %v89
    %1559 = vmatprep.subr.mxu0 %v87
    %1560 = vmatpush1.msra.mxu0 %v86
    %1561 = vmatprep.subr.mxu0 0.0
    %1562 = vmatpush2.msra.mxu0 0.0
    %1563 = vmatprep.subr.mxu0 0.0
    %1564 = vmatpush2.msra.mxu0 0.0
    %1565 = vmatprep.subr.mxu0 0.0
    %1566 = vmatpush2.msra.mxu0 0.0
    %1567 = vmatprep.subr.mxu0 0.0
    %1568 = vmatpush2.msra.mxu0 0.0
    %1569 = vmatprep.subr.mxu0 0.0
    %1570 = vmatpush2.msra.mxu0 0.0
    %1571 = vmatprep.subr.mxu0 0.0
    %1572 = vmatpush2.msra.mxu0 0.0
    %1573 = vmatprep.subr.mxu0 0.0
    %1574 = vmatpush2.msra.mxu0 0.0
    %1575 = vmatprep.subr.mxu0 0.0
    %1576 = vmatpush2.msra.mxu0 0.0
    %1577 = vmatprep.subr.mxu0 0.0
    %1578 = vmatpush2.msra.mxu0 0.0
    %1579 = vmatprep.subr.mxu0 0.0
    %1580 = vmatpush2.msra.mxu0 0.0
    %1581 = vmatprep.subr.mxu0 0.0
    %1582 = vmatpush2.msra.mxu0 0.0
    %1583 = vmatprep.subr.mxu0 0.0
    %1584 = vmatpush2.msra.mxu0 0.0
    %1585 = vmatprep.subr.mxu0 0.0
    %1586 = vmatpush2.msra.mxu0 0.0
    %1587 = vmatprep.subr.mxu0 0.0
    %1588 = vmatpush2.msra.mxu0 0.0
    %1589 = vmatprep.subr.mxu0 0.0
    %1590 = vmatpush2.msra.mxu0 0.0
    %1591 = vmatprep.subr.mxu0 0.0
    %1592 = vmatpush2.msra.mxu0 0.0
    %1593 = vmatprep.mubr.f32.mxu0 0.0
    %1594 = vmatmul.mubr.f32.gmra.mxu0 %v1527
    %v1595 = vpop.f32.mrf.mxu0
    %v1596 = vadd.f32 0.0, %v1595
    %v1597 = vpop.f32.mrf.mxu0
    %v1598 = vadd.f32 0.0, %v1597
    %1599 = vdwg.mxu0
    %1600 = vmatprep.subr.mxu0 0.0
    %1601 = vmatpush1.msra.mxu0 %v133
    %1602 = vmatprep.subr.mxu0 0.0
    %1603 = vmatpush1.msra.mxu0 %v130
    %1604 = vmatprep.subr.mxu0 0.0
    %1605 = vmatpush1.msra.mxu0 %v127
    %1606 = vmatprep.subr.mxu0 0.0
    %1607 = vmatpush1.msra.mxu0 %v124
    %1608 = vmatprep.subr.mxu0 0.0
    %1609 = vmatpush1.msra.mxu0 %v121
    %1610 = vmatprep.subr.mxu0 0.0
    %1611 = vmatpush1.msra.mxu0 %v118
    %1612 = vmatprep.subr.mxu0 0.0
    %1613 = vmatpush1.msra.mxu0 %v115
    %1614 = vmatprep.subr.mxu0 0.0
    %1615 = vmatpush1.msra.mxu0 %v112
    %1616 = vmatprep.subr.mxu0 0.0
    %1617 = vmatpush1.msra.mxu0 %v109
    %1618 = vmatprep.subr.mxu0 0.0
    %1619 = vmatpush1.msra.mxu0 %v106
    %1620 = vmatprep.subr.mxu0 0.0
    %1621 = vmatpush1.msra.mxu0 %v103
    %1622 = vmatprep.subr.mxu0 0.0
    %1623 = vmatpush1.msra.mxu0 %v100
    %1624 = vmatprep.subr.mxu0 0.0
    %1625 = vmatpush1.msra.mxu0 %v97
    %1626 = vmatprep.subr.mxu0 0.0
    %1627 = vmatpush1.msra.mxu0 %v94
    %1628 = vmatprep.subr.mxu0 0.0
    %1629 = vmatpush1.msra.mxu0 %v91
    %1630 = vmatprep.subr.mxu0 0.0
    %1631 = vmatpush1.msra.mxu0 %v88
    %1632 = vmatprep.subr.mxu0 0.0
    %1633 = vmatpush2.msra.mxu0 0.0
    %1634 = vmatprep.subr.mxu0 0.0
    %1635 = vmatpush2.msra.mxu0 0.0
    %1636 = vmatprep.subr.mxu0 0.0
    %1637 = vmatpush2.msra.mxu0 0.0
    %1638 = vmatprep.subr.mxu0 0.0
    %1639 = vmatpush2.msra.mxu0 0.0
    %1640 = vmatprep.subr.mxu0 0.0
    %1641 = vmatpush2.msra.mxu0 0.0
    %1642 = vmatprep.subr.mxu0 0.0
    %1643 = vmatpush2.msra.mxu0 0.0
    %1644 = vmatprep.subr.mxu0 0.0
    %1645 = vmatpush2.msra.mxu0 0.0
    %1646 = vmatprep.subr.mxu0 0.0
    %1647 = vmatpush2.msra.mxu0 0.0
    %1648 = vmatprep.subr.mxu0 0.0
    %1649 = vmatpush2.msra.mxu0 0.0
    %1650 = vmatprep.subr.mxu0 0.0
    %1651 = vmatpush2.msra.mxu0 0.0
    %1652 = vmatprep.subr.mxu0 0.0
    %1653 = vmatpush2.msra.mxu0 0.0
    %1654 = vmatprep.subr.mxu0 0.0
    %1655 = vmatpush2.msra.mxu0 0.0
    %1656 = vmatprep.subr.mxu0 0.0
    %1657 = vmatpush2.msra.mxu0 0.0
    %1658 = vmatprep.subr.mxu0 0.0
    %1659 = vmatpush2.msra.mxu0 0.0
    %1660 = vmatprep.subr.mxu0 0.0
    %1661 = vmatpush2.msra.mxu0 0.0
    %1662 = vmatprep.subr.mxu0 0.0
    %1663 = vmatpush2.msra.mxu0 0.0
    %1664 = vmatprep.mubr.f32.mxu0 0.0
    %1665 = vmatmul.mubr.f32.gmra.mxu0 %v1527
    %v1666 = vpop.f32.mrf.mxu0
    %v1667 = vadd.f32 0.0, %v1666
    %v1668 = vpop.f32.mrf.mxu0
    %1669 = vdwg.mxu0
    %v1672 = vrot.slane %v1596, 3
    %v1673 = vrot.slane %v1598, 3
    %v1676 = vadd.f32 %v84, %v1672
    %v1677 = vadd.f32 %v85, %v1673
    %v1678 = vmul.f32 %v1676, %v281
    %v1679 = vmul.f32 %v1677, %v285
    %v1680 = vtanh.pop %v1678
    %v1681 = vtanh.pop %v1679
    %v1682 = vmul.f32 %v1680, %v281
    %v1683 = vmul.f32 %v1681, %v285
    %v1684 = vadd.f32 %v1682, %v298
    %v1685 = vadd.f32 %v1683, %v302
    %v1687 = vrot.slane %v1423, 7
    %v1689 = vmul.f32 %v1684, %v1687
    %v1690 = vmul.f32 %v1684, %v1685
    %1692 = vrot.lane.b32.xlu0 %v1690, 64
    %v1693 = vpop.permute.xlu0 %1692
    %v1695 = vadd.f32 %v1689, %v1693
    %v1696 = vtanh.pop %v1695
    %v1697 = vmul.f32 %v1685, %v1696
    %v1698 = vadd.f32 %v1667, %v319
    %v1700 = vrot.slane %v1697, 5
    %1702 = vmatprep.subr.mxu0 0.0
    %1703 = vmatpush1.msra.mxu0 %v337
    %1704 = vmatprep.subr.mxu0 0.0
    %1705 = vmatpush1.msra.mxu0 %v336
    %1706 = vmatprep.subr.mxu0 0.0
    %1707 = vmatpush1.msra.mxu0 %v335
    %1708 = vmatprep.subr.mxu0 0.0
    %1709 = vmatpush1.msra.mxu0 %v334
    %1710 = vmatprep.subr.mxu0 0.0
    %1711 = vmatpush1.msra.mxu0 %v333
    %1712 = vmatprep.subr.mxu0 0.0
    %1713 = vmatpush1.msra.mxu0 %v332
    %1714 = vmatprep.subr.mxu0 0.0
    %1715 = vmatpush1.msra.mxu0 %v331
    %1716 = vmatprep.subr.mxu0 0.0
    %1717 = vmatpush1.msra.mxu0 %v330
    %1718 = vmatprep.subr.mxu0 0.0
    %1719 = vmatpush1.msra.mxu0 %v329
    %1720 = vmatprep.subr.mxu0 0.0
    %1721 = vmatpush1.msra.mxu0 %v328
    %1722 = vmatprep.subr.mxu0 0.0
    %1723 = vmatpush1.msra.mxu0 %v327
    %1724 = vmatprep.subr.mxu0 0.0
    %1725 = vmatpush1.msra.mxu0 %v326
    %1726 = vmatprep.subr.mxu0 0.0
    %1727 = vmatpush1.msra.mxu0 %v325
    %1728 = vmatprep.subr.mxu0 0.0
    %1729 = vmatpush1.msra.mxu0 %v324
    %1730 = vmatprep.subr.mxu0 0.0
    %1731 = vmatpush1.msra.mxu0 %v323
    %1732 = vmatprep.subr.mxu0 0.0
    %1733 = vmatpush1.msra.mxu0 %v322
    %1734 = vmatprep.subr.mxu0 0.0
    %1735 = vmatpush2.msra.mxu0 0.0
    %1736 = vmatprep.subr.mxu0 0.0
    %1737 = vmatpush2.msra.mxu0 0.0
    %1738 = vmatprep.subr.mxu0 0.0
    %1739 = vmatpush2.msra.mxu0 0.0
    %1740 = vmatprep.subr.mxu0 0.0
    %1741 = vmatpush2.msra.mxu0 0.0
    %1742 = vmatprep.subr.mxu0 0.0
    %1743 = vmatpush2.msra.mxu0 0.0
    %1744 = vmatprep.subr.mxu0 0.0
    %1745 = vmatpush2.msra.mxu0 0.0
    %1746 = vmatprep.subr.mxu0 0.0
    %1747 = vmatpush2.msra.mxu0 0.0
    %1748 = vmatprep.subr.mxu0 0.0
    %1749 = vmatpush2.msra.mxu0 0.0
    %1750 = vmatprep.subr.mxu0 0.0
    %1751 = vmatpush2.msra.mxu0 0.0
    %1752 = vmatprep.subr.mxu0 0.0
    %1753 = vmatpush2.msra.mxu0 0.0
    %1754 = vmatprep.subr.mxu0 0.0
    %1755 = vmatpush2.msra.mxu0 0.0
    %1756 = vmatprep.subr.mxu0 0.0
    %1757 = vmatpush2.msra.mxu0 0.0
    %1758 = vmatprep.subr.mxu0 0.0
    %1759 = vmatpush2.msra.mxu0 0.0
    %1760 = vmatprep.subr.mxu0 0.0
    %1761 = vmatpush2.msra.mxu0 0.0
    %1762 = vmatprep.subr.mxu0 0.0
    %1763 = vmatpush2.msra.mxu0 0.0
    %1764 = vmatprep.subr.mxu0 0.0
    %1765 = vmatpush2.msra.mxu0 0.0
    %1766 = vmatprep.mubr.f32.mxu0 0.0
    %1767 = vmatmul.mubr.f32.gmra.mxu0 %v1700
    %v1768 = vpop.f32.mrf.mxu0
    %v1769 = vadd.f32 0.0, %v1768
    %v1770 = vpop.f32.mrf.mxu0
    %1771 = vdwg.mxu0
    %v1772 = vadd.f32 %v1698, %v1769
    %v1773 = vmul.f32 %v1772, %v412
    %v1774 = vtanh.pop %v1773
    %v1775 = vmul.f32 %v1774, %v412
    %v1776 = vadd.f32 %v1775, %v420
    %1778 = vrot.lane.b32.xlu0 %v1776, 64
    %v1779 = vpop.permute.xlu0 %1778
    %v1781 = vmul.f32 %v1776, %v1515
    %v1782 = vmul.f32 %v1776, %v1779
    %1784 = vrot.lane.b32.xlu0 %v1782, 96
    %v1785 = vpop.permute.xlu0 %1784
    %v1787 = vadd.f32 %v1781, %v1785
    %v1788 = vtanh.pop %v1787
    %v1789 = vmul.f32 %v1779, %v1788
    %1791 = vrot.lane.b32.xlu0 %v1789, 64
    %v1792 = vpop.permute.xlu0 %1791
    %v1795 = vrot.slane %v1792, 3
    %v1797 = vsel %vm53, %v1697, %v1795
    %v1799 = vrot.slane %v1797, 5
    %1801 = vmatprep.subr.mxu0 %v132
    %1802 = vmatpush1.msra.mxu0 %v131
    %1803 = vmatprep.subr.mxu0 %v129
    %1804 = vmatpush1.msra.mxu0 %v128
    %1805 = vmatprep.subr.mxu0 %v126
    %1806 = vmatpush1.msra.mxu0 %v125
    %1807 = vmatprep.subr.mxu0 %v123
    %1808 = vmatpush1.msra.mxu0 %v122
    %1809 = vmatprep.subr.mxu0 %v120
    %1810 = vmatpush1.msra.mxu0 %v119
    %1811 = vmatprep.subr.mxu0 %v117
    %1812 = vmatpush1.msra.mxu0 %v116
    %1813 = vmatprep.subr.mxu0 %v114
    %1814 = vmatpush1.msra.mxu0 %v113
    %1815 = vmatprep.subr.mxu0 %v111
    %1816 = vmatpush1.msra.mxu0 %v110
    %1817 = vmatprep.subr.mxu0 %v108
    %1818 = vmatpush1.msra.mxu0 %v107
    %1819 = vmatprep.subr.mxu0 %v105
    %1820 = vmatpush1.msra.mxu0 %v104
    %1821 = vmatprep.subr.mxu0 %v102
    %1822 = vmatpush1.msra.mxu0 %v101
    %1823 = vmatprep.subr.mxu0 %v99
    %1824 = vmatpush1.msra.mxu0 %v98
    %1825 = vmatprep.subr.mxu0 %v96
    %1826 = vmatpush1.msra.mxu0 %v95
    %1827 = vmatprep.subr.mxu0 %v93
    %1828 = vmatpush1.msra.mxu0 %v92
    %1829 = vmatprep.subr.mxu0 %v90
    %1830 = vmatpush1.msra.mxu0 %v89
    %1831 = vmatprep.subr.mxu0 %v87
    %1832 = vmatpush1.msra.mxu0 %v86
    %1833 = vmatprep.subr.mxu0 0.0
    %1834 = vmatpush2.msra.mxu0 0.0
    %1835 = vmatprep.subr.mxu0 0.0
    %1836 = vmatpush2.msra.mxu0 0.0
    %1837 = vmatprep.subr.mxu0 0.0
    %1838 = vmatpush2.msra.mxu0 0.0
    %1839 = vmatprep.subr.mxu0 0.0
    %1840 = vmatpush2.msra.mxu0 0.0
    %1841 = vmatprep.subr.mxu0 0.0
    %1842 = vmatpush2.msra.mxu0 0.0
    %1843 = vmatprep.subr.mxu0 0.0
    %1844 = vmatpush2.msra.mxu0 0.0
    %1845 = vmatprep.subr.mxu0 0.0
    %1846 = vmatpush2.msra.mxu0 0.0
    %1847 = vmatprep.subr.mxu0 0.0
    %1848 = vmatpush2.msra.mxu0 0.0
    %1849 = vmatprep.subr.mxu0 0.0
    %1850 = vmatpush2.msra.mxu0 0.0
    %1851 = vmatprep.subr.mxu0 0.0
    %1852 = vmatpush2.msra.mxu0 0.0
    %1853 = vmatprep.subr.mxu0 0.0
    %1854 = vmatpush2.msra.mxu0 0.0
    %1855 = vmatprep.subr.mxu0 0.0
    %1856 = vmatpush2.msra.mxu0 0.0
    %1857 = vmatprep.subr.mxu0 0.0
    %1858 = vmatpush2.msra.mxu0 0.0
    %1859 = vmatprep.subr.mxu0 0.0
    %1860 = vmatpush2.msra.mxu0 0.0
    %1861 = vmatprep.subr.mxu0 0.0
    %1862 = vmatpush2.msra.mxu0 0.0
    %1863 = vmatprep.subr.mxu0 0.0
    %1864 = vmatpush2.msra.mxu0 0.0
    %1865 = vmatprep.mubr.f32.mxu0 0.0
    %1866 = vmatmul.mubr.f32.gmra.mxu0 %v1799
    %v1867 = vpop.f32.mrf.mxu0
    %v1868 = vadd.f32 0.0, %v1867
    %v1869 = vpop.f32.mrf.mxu0
    %v1870 = vadd.f32 0.0, %v1869
    %1871 = vdwg.mxu0
    %1872 = vmatprep.subr.mxu0 0.0
    %1873 = vmatpush1.msra.mxu0 %v133
    %1874 = vmatprep.subr.mxu0 0.0
    %1875 = vmatpush1.msra.mxu0 %v130
    %1876 = vmatprep.subr.mxu0 0.0
    %1877 = vmatpush1.msra.mxu0 %v127
    %1878 = vmatprep.subr.mxu0 0.0
    %1879 = vmatpush1.msra.mxu0 %v124
    %1880 = vmatprep.subr.mxu0 0.0
    %1881 = vmatpush1.msra.mxu0 %v121
    %1882 = vmatprep.subr.mxu0 0.0
    %1883 = vmatpush1.msra.mxu0 %v118
    %1884 = vmatprep.subr.mxu0 0.0
    %1885 = vmatpush1.msra.mxu0 %v115
    %1886 = vmatprep.subr.mxu0 0.0
    %1887 = vmatpush1.msra.mxu0 %v112
    %1888 = vmatprep.subr.mxu0 0.0
    %1889 = vmatpush1.msra.mxu0 %v109
    %1890 = vmatprep.subr.mxu0 0.0
    %1891 = vmatpush1.msra.mxu0 %v106
    %1892 = vmatprep.subr.mxu0 0.0
    %1893 = vmatpush1.msra.mxu0 %v103
    %1894 = vmatprep.subr.mxu0 0.0
    %1895 = vmatpush1.msra.mxu0 %v100
    %1896 = vmatprep.subr.mxu0 0.0
    %1897 = vmatpush1.msra.mxu0 %v97
    %1898 = vmatprep.subr.mxu0 0.0
    %1899 = vmatpush1.msra.mxu0 %v94
    %1900 = vmatprep.subr.mxu0 0.0
    %1901 = vmatpush1.msra.mxu0 %v91
    %1902 = vmatprep.subr.mxu0 0.0
    %1903 = vmatpush1.msra.mxu0 %v88
    %1904 = vmatprep.subr.mxu0 0.0
    %1905 = vmatpush2.msra.mxu0 0.0
    %1906 = vmatprep.subr.mxu0 0.0
    %1907 = vmatpush2.msra.mxu0 0.0
    %1908 = vmatprep.subr.mxu0 0.0
    %1909 = vmatpush2.msra.mxu0 0.0
    %1910 = vmatprep.subr.mxu0 0.0
    %1911 = vmatpush2.msra.mxu0 0.0
    %1912 = vmatprep.subr.mxu0 0.0
    %1913 = vmatpush2.msra.mxu0 0.0
    %1914 = vmatprep.subr.mxu0 0.0
    %1915 = vmatpush2.msra.mxu0 0.0
    %1916 = vmatprep.subr.mxu0 0.0
    %1917 = vmatpush2.msra.mxu0 0.0
    %1918 = vmatprep.subr.mxu0 0.0
    %1919 = vmatpush2.msra.mxu0 0.0
    %1920 = vmatprep.subr.mxu0 0.0
    %1921 = vmatpush2.msra.mxu0 0.0
    %1922 = vmatprep.subr.mxu0 0.0
    %1923 = vmatpush2.msra.mxu0 0.0
    %1924 = vmatprep.subr.mxu0 0.0
    %1925 = vmatpush2.msra.mxu0 0.0
    %1926 = vmatprep.subr.mxu0 0.0
    %1927 = vmatpush2.msra.mxu0 0.0
    %1928 = vmatprep.subr.mxu0 0.0
    %1929 = vmatpush2.msra.mxu0 0.0
    %1930 = vmatprep.subr.mxu0 0.0
    %1931 = vmatpush2.msra.mxu0 0.0
    %1932 = vmatprep.subr.mxu0 0.0
    %1933 = vmatpush2.msra.mxu0 0.0
    %1934 = vmatprep.subr.mxu0 0.0
    %1935 = vmatpush2.msra.mxu0 0.0
    %1936 = vmatprep.mubr.f32.mxu0 0.0
    %1937 = vmatmul.mubr.f32.gmra.mxu0 %v1799
    %v1938 = vpop.f32.mrf.mxu0
    %v1939 = vadd.f32 0.0, %v1938
    %v1940 = vpop.f32.mrf.mxu0
    %1941 = vdwg.mxu0
    %v1944 = vrot.slane %v1868, 2
    %v1945 = vrot.slane %v1870, 2
    %v1948 = vadd.f32 %v84, %v1944
    %v1949 = vadd.f32 %v85, %v1945
    %v1950 = vmul.f32 %v1948, %v281
    %v1951 = vmul.f32 %v1949, %v285
    %v1952 = vtanh.pop %v1950
    %v1953 = vtanh.pop %v1951
    %v1954 = vmul.f32 %v1952, %v281
    %v1955 = vmul.f32 %v1953, %v285
    %v1956 = vadd.f32 %v1954, %v298
    %v1957 = vadd.f32 %v1955, %v302
    %v1959 = vrot.slane %v1695, 7
    %v1961 = vmul.f32 %v1956, %v1959
    %v1962 = vmul.f32 %v1956, %v1957
    %1964 = vrot.lane.b32.xlu0 %v1962, 64
    %v1965 = vpop.permute.xlu0 %1964
    %v1967 = vadd.f32 %v1961, %v1965
    %v1968 = vtanh.pop %v1967
    %v1969 = vmul.f32 %v1957, %v1968
    %v1970 = vadd.f32 %v1939, %v319
    %v1972 = vrot.slane %v1969, 6
    %1974 = vmatprep.subr.mxu0 0.0
    %1975 = vmatpush1.msra.mxu0 %v337
    %1976 = vmatprep.subr.mxu0 0.0
    %1977 = vmatpush1.msra.mxu0 %v336
    %1978 = vmatprep.subr.mxu0 0.0
    %1979 = vmatpush1.msra.mxu0 %v335
    %1980 = vmatprep.subr.mxu0 0.0
    %1981 = vmatpush1.msra.mxu0 %v334
    %1982 = vmatprep.subr.mxu0 0.0
    %1983 = vmatpush1.msra.mxu0 %v333
    %1984 = vmatprep.subr.mxu0 0.0
    %1985 = vmatpush1.msra.mxu0 %v332
    %1986 = vmatprep.subr.mxu0 0.0
    %1987 = vmatpush1.msra.mxu0 %v331
    %1988 = vmatprep.subr.mxu0 0.0
    %1989 = vmatpush1.msra.mxu0 %v330
    %1990 = vmatprep.subr.mxu0 0.0
    %1991 = vmatpush1.msra.mxu0 %v329
    %1992 = vmatprep.subr.mxu0 0.0
    %1993 = vmatpush1.msra.mxu0 %v328
    %1994 = vmatprep.subr.mxu0 0.0
    %1995 = vmatpush1.msra.mxu0 %v327
    %1996 = vmatprep.subr.mxu0 0.0
    %1997 = vmatpush1.msra.mxu0 %v326
    %1998 = vmatprep.subr.mxu0 0.0
    %1999 = vmatpush1.msra.mxu0 %v325
    %2000 = vmatprep.subr.mxu0 0.0
    %2001 = vmatpush1.msra.mxu0 %v324
    %2002 = vmatprep.subr.mxu0 0.0
    %2003 = vmatpush1.msra.mxu0 %v323
    %2004 = vmatprep.subr.mxu0 0.0
    %2005 = vmatpush1.msra.mxu0 %v322
    %2006 = vmatprep.subr.mxu0 0.0
    %2007 = vmatpush2.msra.mxu0 0.0
    %2008 = vmatprep.subr.mxu0 0.0
    %2009 = vmatpush2.msra.mxu0 0.0
    %2010 = vmatprep.subr.mxu0 0.0
    %2011 = vmatpush2.msra.mxu0 0.0
    %2012 = vmatprep.subr.mxu0 0.0
    %2013 = vmatpush2.msra.mxu0 0.0
    %2014 = vmatprep.subr.mxu0 0.0
    %2015 = vmatpush2.msra.mxu0 0.0
    %2016 = vmatprep.subr.mxu0 0.0
    %2017 = vmatpush2.msra.mxu0 0.0
    %2018 = vmatprep.subr.mxu0 0.0
    %2019 = vmatpush2.msra.mxu0 0.0
    %2020 = vmatprep.subr.mxu0 0.0
    %2021 = vmatpush2.msra.mxu0 0.0
    %2022 = vmatprep.subr.mxu0 0.0
    %2023 = vmatpush2.msra.mxu0 0.0
    %2024 = vmatprep.subr.mxu0 0.0
    %2025 = vmatpush2.msra.mxu0 0.0
    %2026 = vmatprep.subr.mxu0 0.0
    %2027 = vmatpush2.msra.mxu0 0.0
    %2028 = vmatprep.subr.mxu0 0.0
    %2029 = vmatpush2.msra.mxu0 0.0
    %2030 = vmatprep.subr.mxu0 0.0
    %2031 = vmatpush2.msra.mxu0 0.0
    %2032 = vmatprep.subr.mxu0 0.0
    %2033 = vmatpush2.msra.mxu0 0.0
    %2034 = vmatprep.subr.mxu0 0.0
    %2035 = vmatpush2.msra.mxu0 0.0
    %2036 = vmatprep.subr.mxu0 0.0
    %2037 = vmatpush2.msra.mxu0 0.0
    %2038 = vmatprep.mubr.f32.mxu0 0.0
    %2039 = vmatmul.mubr.f32.gmra.mxu0 %v1972
    %v2040 = vpop.f32.mrf.mxu0
    %v2041 = vadd.f32 0.0, %v2040
    %v2042 = vpop.f32.mrf.mxu0
    %2043 = vdwg.mxu0
    %v2044 = vadd.f32 %v1970, %v2041
    %v2045 = vmul.f32 %v2044, %v412
    %v2046 = vtanh.pop %v2045
    %v2047 = vmul.f32 %v2046, %v412
    %v2048 = vadd.f32 %v2047, %v420
    %2050 = vrot.lane.b32.xlu0 %v2048, 64
    %v2051 = vpop.permute.xlu0 %2050
    %v2053 = vmul.f32 %v2048, %v1787
    %v2054 = vmul.f32 %v2048, %v2051
    %2056 = vrot.lane.b32.xlu0 %v2054, 96
    %v2057 = vpop.permute.xlu0 %2056
    %v2059 = vadd.f32 %v2053, %v2057
    %v2060 = vtanh.pop %v2059
    %v2061 = vmul.f32 %v2051, %v2060
    %2063 = vrot.lane.b32.xlu0 %v2061, 64
    %v2064 = vpop.permute.xlu0 %2063
    %v2067 = vrot.slane %v2064, 2
    %v2069 = vsel %vm53, %v1969, %v2067
    %v2071 = vrot.slane %v2069, 6
    %2073 = vmatprep.subr.mxu0 %v132
    %2074 = vmatpush1.msra.mxu0 %v131
    %2075 = vmatprep.subr.mxu0 %v129
    %2076 = vmatpush1.msra.mxu0 %v128
    %2077 = vmatprep.subr.mxu0 %v126
    %2078 = vmatpush1.msra.mxu0 %v125
    %2079 = vmatprep.subr.mxu0 %v123
    %2080 = vmatpush1.msra.mxu0 %v122
    %2081 = vmatprep.subr.mxu0 %v120
    %2082 = vmatpush1.msra.mxu0 %v119
    %2083 = vmatprep.subr.mxu0 %v117
    %2084 = vmatpush1.msra.mxu0 %v116
    %2085 = vmatprep.subr.mxu0 %v114
    %2086 = vmatpush1.msra.mxu0 %v113
    %2087 = vmatprep.subr.mxu0 %v111
    %2088 = vmatpush1.msra.mxu0 %v110
    %2089 = vmatprep.subr.mxu0 %v108
    %2090 = vmatpush1.msra.mxu0 %v107
    %2091 = vmatprep.subr.mxu0 %v105
    %2092 = vmatpush1.msra.mxu0 %v104
    %2093 = vmatprep.subr.mxu0 %v102
    %2094 = vmatpush1.msra.mxu0 %v101
    %2095 = vmatprep.subr.mxu0 %v99
    %2096 = vmatpush1.msra.mxu0 %v98
    %2097 = vmatprep.subr.mxu0 %v96
    %2098 = vmatpush1.msra.mxu0 %v95
    %2099 = vmatprep.subr.mxu0 %v93
    %2100 = vmatpush1.msra.mxu0 %v92
    %2101 = vmatprep.subr.mxu0 %v90
    %2102 = vmatpush1.msra.mxu0 %v89
    %2103 = vmatprep.subr.mxu0 %v87
    %2104 = vmatpush1.msra.mxu0 %v86
    %2105 = vmatprep.subr.mxu0 0.0
    %2106 = vmatpush2.msra.mxu0 0.0
    %2107 = vmatprep.subr.mxu0 0.0
    %2108 = vmatpush2.msra.mxu0 0.0
    %2109 = vmatprep.subr.mxu0 0.0
    %2110 = vmatpush2.msra.mxu0 0.0
    %2111 = vmatprep.subr.mxu0 0.0
    %2112 = vmatpush2.msra.mxu0 0.0
    %2113 = vmatprep.subr.mxu0 0.0
    %2114 = vmatpush2.msra.mxu0 0.0
    %2115 = vmatprep.subr.mxu0 0.0
    %2116 = vmatpush2.msra.mxu0 0.0
    %2117 = vmatprep.subr.mxu0 0.0
    %2118 = vmatpush2.msra.mxu0 0.0
    %2119 = vmatprep.subr.mxu0 0.0
    %2120 = vmatpush2.msra.mxu0 0.0
    %2121 = vmatprep.subr.mxu0 0.0
    %2122 = vmatpush2.msra.mxu0 0.0
    %2123 = vmatprep.subr.mxu0 0.0
    %2124 = vmatpush2.msra.mxu0 0.0
    %2125 = vmatprep.subr.mxu0 0.0
    %2126 = vmatpush2.msra.mxu0 0.0
    %2127 = vmatprep.subr.mxu0 0.0
    %2128 = vmatpush2.msra.mxu0 0.0
    %2129 = vmatprep.subr.mxu0 0.0
    %2130 = vmatpush2.msra.mxu0 0.0
    %2131 = vmatprep.subr.mxu0 0.0
    %2132 = vmatpush2.msra.mxu0 0.0
    %2133 = vmatprep.subr.mxu0 0.0
    %2134 = vmatpush2.msra.mxu0 0.0
    %2135 = vmatprep.subr.mxu0 0.0
    %2136 = vmatpush2.msra.mxu0 0.0
    %2137 = vmatprep.mubr.f32.mxu0 0.0
    %2138 = vmatmul.mubr.f32.gmra.mxu0 %v2071
    %v2139 = vpop.f32.mrf.mxu0
    %v2140 = vadd.f32 0.0, %v2139
    %v2141 = vpop.f32.mrf.mxu0
    %v2142 = vadd.f32 0.0, %v2141
    %2143 = vdwg.mxu0
    %2144 = vmatprep.subr.mxu0 0.0
    %2145 = vmatpush1.msra.mxu0 %v133
    %2146 = vmatprep.subr.mxu0 0.0
    %2147 = vmatpush1.msra.mxu0 %v130
    %2148 = vmatprep.subr.mxu0 0.0
    %2149 = vmatpush1.msra.mxu0 %v127
    %2150 = vmatprep.subr.mxu0 0.0
    %2151 = vmatpush1.msra.mxu0 %v124
    %2152 = vmatprep.subr.mxu0 0.0
    %2153 = vmatpush1.msra.mxu0 %v121
    %2154 = vmatprep.subr.mxu0 0.0
    %2155 = vmatpush1.msra.mxu0 %v118
    %2156 = vmatprep.subr.mxu0 0.0
    %2157 = vmatpush1.msra.mxu0 %v115
    %2158 = vmatprep.subr.mxu0 0.0
    %2159 = vmatpush1.msra.mxu0 %v112
    %2160 = vmatprep.subr.mxu0 0.0
    %2161 = vmatpush1.msra.mxu0 %v109
    %2162 = vmatprep.subr.mxu0 0.0
    %2163 = vmatpush1.msra.mxu0 %v106
    %2164 = vmatprep.subr.mxu0 0.0
    %2165 = vmatpush1.msra.mxu0 %v103
    %2166 = vmatprep.subr.mxu0 0.0
    %2167 = vmatpush1.msra.mxu0 %v100
    %2168 = vmatprep.subr.mxu0 0.0
    %2169 = vmatpush1.msra.mxu0 %v97
    %2170 = vmatprep.subr.mxu0 0.0
    %2171 = vmatpush1.msra.mxu0 %v94
    %2172 = vmatprep.subr.mxu0 0.0
    %2173 = vmatpush1.msra.mxu0 %v91
    %2174 = vmatprep.subr.mxu0 0.0
    %2175 = vmatpush1.msra.mxu0 %v88
    %2176 = vmatprep.subr.mxu0 0.0
    %2177 = vmatpush2.msra.mxu0 0.0
    %2178 = vmatprep.subr.mxu0 0.0
    %2179 = vmatpush2.msra.mxu0 0.0
    %2180 = vmatprep.subr.mxu0 0.0
    %2181 = vmatpush2.msra.mxu0 0.0
    %2182 = vmatprep.subr.mxu0 0.0
    %2183 = vmatpush2.msra.mxu0 0.0
    %2184 = vmatprep.subr.mxu0 0.0
    %2185 = vmatpush2.msra.mxu0 0.0
    %2186 = vmatprep.subr.mxu0 0.0
    %2187 = vmatpush2.msra.mxu0 0.0
    %2188 = vmatprep.subr.mxu0 0.0
    %2189 = vmatpush2.msra.mxu0 0.0
    %2190 = vmatprep.subr.mxu0 0.0
    %2191 = vmatpush2.msra.mxu0 0.0
    %2192 = vmatprep.subr.mxu0 0.0
    %2193 = vmatpush2.msra.mxu0 0.0
    %2194 = vmatprep.subr.mxu0 0.0
    %2195 = vmatpush2.msra.mxu0 0.0
    %2196 = vmatprep.subr.mxu0 0.0
    %2197 = vmatpush2.msra.mxu0 0.0
    %2198 = vmatprep.subr.mxu0 0.0
    %2199 = vmatpush2.msra.mxu0 0.0
    %2200 = vmatprep.subr.mxu0 0.0
    %2201 = vmatpush2.msra.mxu0 0.0
    %2202 = vmatprep.subr.mxu0 0.0
    %2203 = vmatpush2.msra.mxu0 0.0
    %2204 = vmatprep.subr.mxu0 0.0
    %2205 = vmatpush2.msra.mxu0 0.0
    %2206 = vmatprep.subr.mxu0 0.0
    %2207 = vmatpush2.msra.mxu0 0.0
    %2208 = vmatprep.mubr.f32.mxu0 0.0
    %2209 = vmatmul.mubr.f32.gmra.mxu0 %v2071
    %v2210 = vpop.f32.mrf.mxu0
    %v2211 = vadd.f32 0.0, %v2210
    %v2212 = vpop.f32.mrf.mxu0
    %2213 = vdwg.mxu0
    %v2216 = vrot.slane %v2140, 1
    %v2217 = vrot.slane %v2142, 1
    %v2220 = vadd.f32 %v84, %v2216
    %v2221 = vadd.f32 %v85, %v2217
    %v2222 = vmul.f32 %v2220, %v281
    %v2223 = vmul.f32 %v2221, %v285
    %v2224 = vtanh.pop %v2222
    %v2225 = vtanh.pop %v2223
    %v2226 = vmul.f32 %v2224, %v281
    %v2227 = vmul.f32 %v2225, %v285
    %v2228 = vadd.f32 %v2226, %v298
    %v2229 = vadd.f32 %v2227, %v302
    %v2231 = vrot.slane %v1967, 7
    %v2233 = vmul.f32 %v2228, %v2231
    %v2234 = vmul.f32 %v2228, %v2229
    %2236 = vrot.lane.b32.xlu0 %v2234, 64
    %v2237 = vpop.permute.xlu0 %2236
    %v2239 = vadd.f32 %v2233, %v2237
    %v2240 = vtanh.pop %v2239
    %v2241 = vmul.f32 %v2229, %v2240
    %v2242 = vadd.f32 %v2211, %v319
    %v2244 = vrot.slane %v2241, 7
    %2246 = vmatprep.subr.mxu0 0.0
    %2247 = vmatpush1.msra.mxu0 %v337
    %2248 = vmatprep.subr.mxu0 0.0
    %2249 = vmatpush1.msra.mxu0 %v336
    %2250 = vmatprep.subr.mxu0 0.0
    %2251 = vmatpush1.msra.mxu0 %v335
    %2252 = vmatprep.subr.mxu0 0.0
    %2253 = vmatpush1.msra.mxu0 %v334
    %2254 = vmatprep.subr.mxu0 0.0
    %2255 = vmatpush1.msra.mxu0 %v333
    %2256 = vmatprep.subr.mxu0 0.0
    %2257 = vmatpush1.msra.mxu0 %v332
    %2258 = vmatprep.subr.mxu0 0.0
    %2259 = vmatpush1.msra.mxu0 %v331
    %2260 = vmatprep.subr.mxu0 0.0
    %2261 = vmatpush1.msra.mxu0 %v330
    %2262 = vmatprep.subr.mxu0 0.0
    %2263 = vmatpush1.msra.mxu0 %v329
    %2264 = vmatprep.subr.mxu0 0.0
    %2265 = vmatpush1.msra.mxu0 %v328
    %2266 = vmatprep.subr.mxu0 0.0
    %2267 = vmatpush1.msra.mxu0 %v327
    %2268 = vmatprep.subr.mxu0 0.0
    %2269 = vmatpush1.msra.mxu0 %v326
    %2270 = vmatprep.subr.mxu0 0.0
    %2271 = vmatpush1.msra.mxu0 %v325
    %2272 = vmatprep.subr.mxu0 0.0
    %2273 = vmatpush1.msra.mxu0 %v324
    %2274 = vmatprep.subr.mxu0 0.0
    %2275 = vmatpush1.msra.mxu0 %v323
    %2276 = vmatprep.subr.mxu0 0.0
    %2277 = vmatpush1.msra.mxu0 %v322
    %2278 = vmatprep.subr.mxu0 0.0
    %2279 = vmatpush2.msra.mxu0 0.0
    %2280 = vmatprep.subr.mxu0 0.0
    %2281 = vmatpush2.msra.mxu0 0.0
    %2282 = vmatprep.subr.mxu0 0.0
    %2283 = vmatpush2.msra.mxu0 0.0
    %2284 = vmatprep.subr.mxu0 0.0
    %2285 = vmatpush2.msra.mxu0 0.0
    %2286 = vmatprep.subr.mxu0 0.0
    %2287 = vmatpush2.msra.mxu0 0.0
    %2288 = vmatprep.subr.mxu0 0.0
    %2289 = vmatpush2.msra.mxu0 0.0
    %2290 = vmatprep.subr.mxu0 0.0
    %2291 = vmatpush2.msra.mxu0 0.0
    %2292 = vmatprep.subr.mxu0 0.0
    %2293 = vmatpush2.msra.mxu0 0.0
    %2294 = vmatprep.subr.mxu0 0.0
    %2295 = vmatpush2.msra.mxu0 0.0
    %2296 = vmatprep.subr.mxu0 0.0
    %2297 = vmatpush2.msra.mxu0 0.0
    %2298 = vmatprep.subr.mxu0 0.0
    %2299 = vmatpush2.msra.mxu0 0.0
    %2300 = vmatprep.subr.mxu0 0.0
    %2301 = vmatpush2.msra.mxu0 0.0
    %2302 = vmatprep.subr.mxu0 0.0
    %2303 = vmatpush2.msra.mxu0 0.0
    %2304 = vmatprep.subr.mxu0 0.0
    %2305 = vmatpush2.msra.mxu0 0.0
    %2306 = vmatprep.subr.mxu0 0.0
    %2307 = vmatpush2.msra.mxu0 0.0
    %2308 = vmatprep.subr.mxu0 0.0
    %2309 = vmatpush2.msra.mxu0 0.0
    %2310 = vmatprep.mubr.f32.mxu0 0.0
    %2311 = vmatmul.mubr.f32.gmra.mxu0 %v2244
    %v2312 = vpop.f32.mrf.mxu0
    %v2313 = vadd.f32 0.0, %v2312
    %v2314 = vpop.f32.mrf.mxu0
    %2315 = vdwg.mxu0
    %v2316 = vadd.f32 %v2242, %v2313
    %v2317 = vmul.f32 %v2316, %v412
    %v2318 = vtanh.pop %v2317
    %v2319 = vmul.f32 %v2318, %v412
    %v2320 = vadd.f32 %v2319, %v420
    %2322 = vrot.lane.b32.xlu0 %v2320, 64
    %v2323 = vpop.permute.xlu0 %2322
    %v2325 = vmul.f32 %v2320, %v2059
    %v2326 = vmul.f32 %v2320, %v2323
    %2328 = vrot.lane.b32.xlu0 %v2326, 96
    %v2329 = vpop.permute.xlu0 %2328
    %v2331 = vadd.f32 %v2325, %v2329
    %v2332 = vtanh.pop %v2331
    %v2333 = vmul.f32 %v2323, %v2332
    %2334 = vst [vmem:[#allocation7] sm:$0x1] %v2333
    // Predicated region
    $region22: #{tpu_custom_call.1} parent=1 // pred_check
      _
    $region23: #{tpu_custom_call.1} parent=1 // pred_check_branch
      %2336 = sbr.rel (0) target = $region25
    $region24: #{tpu_custom_call.1} parent=1 // pred_region
      %s2338 = ssub.s32 16, 16
      %2339 = vsyncadd [#allocation4], %s2338
      %s2341 = sshll.u32 [#allocation7], 4
      %s2342 = int_to_ptr.vmem [resolvable:$true] %s2341
      %2344 = dma.vmem_to_hbm [thread:$0]  %s2342, 16, %s3, [#allocation4]
    $region25: #{tpu_custom_call.1} parent=1 // pred_fallthru
      _
    // Predicated region
    $region26: #{tpu_custom_call.1} parent=1 // pred_check
      _
    $region27: #{tpu_custom_call.1} parent=1 // pred_check_branch
      %2346 = sbr.rel (0) target = $region29
    $region28: #{tpu_custom_call.1} parent=1 // pred_region
      %2347 = dma.done [#allocation4], 16
    $region29: #{tpu_custom_call.1} parent=1 // pred_fallthru
      _
    %2348 = vsyncpa [#allocation3], 1
    %2349 = vsyncpa [#allocation6], 1
    %2350 = vsyncpa [#allocation4], 1

</llo_original>
